<compile_context>
chip_gen: v7x
topology: tpu7x:2x2x1
jax: 0.10.0
libtpu: 0.0.40
codegen_flags: <defaults>
</compile_context>

<pallas_src>
import numpy as np

import jax
import jax.numpy as jnp
from jax.experimental import pallas as pl
from jax.experimental.pallas import tpu as pltpu

_LANE = 128
_SUBLANE = 8


def _round_up(n, m):
    return ((n + m - 1) // m) * m


def head_kernel(x_ref, w1_ref, b1_ref, w2_ref, o_ref, acc_ref):
    """One (batch-tile, hidden-slice) program, reducing over the K grid axis.

    x_ref  : (tb, tk)     bf16 K-tile of the flattened input
    w1_ref : (tk, dh)     bf16 K-tile of W1's hidden slice ((in, out) layout)
    b1_ref : (1, dh)      f32 bias slice of the first Linear
    w2_ref : (dh, Do)     f32 hidden slice of the second Linear ((in, out))
    o_ref  : (1, tb, Do)  partial output contributed by this hidden slice
    acc_ref: (tb, dh) f32 resident accumulator across the K grid axis
    """
    k = pl.program_id(2)

    @pl.when(k == 0)
    def _init():
        acc_ref[...] = jnp.zeros_like(acc_ref)

    acc_ref[...] += jnp.dot(
        x_ref[...], w1_ref[...], preferred_element_type=jnp.float32
    )

    @pl.when(k == pl.num_programs(2) - 1)
    def _finish():
        hidden = jnp.maximum(acc_ref[...] + b1_ref[0, :], 0.0)
        # TODO(synk): Dropout(0.5) modeled as inference-mode identity; training
        # mode needs a pltpu.prng_seed/prng_random_bits mask and 1/(1-p) scaling.
        o_ref[0] = jnp.dot(
            hidden, w2_ref[...], preferred_element_type=jnp.float32
        ).astype(o_ref.dtype)


def _pick_k_tile(K, dh_blk, *, weight_bytes=2, budget_bytes=2 << 20, min_steps=2):
    """Largest lane-aligned divisor of K whose W1 tile fits the byte budget,
    preferring >= `min_steps` K-steps so the W1/x DMA overlaps the matmul."""
    fits = [
        tk
        for tk in (8192, 4096, 2048, 1024, 512, 256, 128)
        if K % tk == 0
        and tk * _round_up(dh_blk, _LANE) * weight_bytes <= budget_bytes
    ]
    if not fits:
        return K  # single full-K block (legal: block dim == array dim)
    for tk in fits:
        if K // tk >= min_steps:
            return tk
    return fits[0]


def _estimate_vmem_bytes(tb, tk, dh_blk, Do):
    """Rough per-core VMEM footprint: double-buffered pipeline + scratch."""
    lane = lambda n: _round_up(n, _LANE)
    x_buf = 2 * tb * tk * 2                      # bf16 x tile, 2 buffers
    w1_buf = 2 * tk * lane(dh_blk) * 2           # bf16 W1 tile, 2 buffers
    b1_buf = 2 * _SUBLANE * lane(dh_blk) * 4
    w2_buf = 2 * dh_blk * lane(Do) * 4
    out_buf = 2 * tb * lane(Do) * 4
    acc = tb * lane(dh_blk) * 4
    return x_buf + w1_buf + b1_buf + w2_buf + out_buf + acc


def head_forward(x, w1, b1, w2, b2):
    """x: (N, C, 32, 32); w1: (C*32*32, Dh); b1: (Dh,); w2: (Dh, Do); b2: (Do,)."""
    N = x.shape[0]
    K = int(np.prod(x.shape[1:]))
    Dh = w1.shape[1]
    Do = w2.shape[1]

    # torch.nn.Flatten on NCHW == row-major reshape.
    x_flat = x.reshape(N, K)

    # Stream the large operands as bf16 (f32 accumulation happens in-kernel).
    x_bf = x_flat.astype(jnp.bfloat16)
    w1_bf = w1.astype(jnp.bfloat16)

    # Batch tiling: pad N up to a sublane group; 128-row tiles once N grows.
    tb = _LANE if N >= _LANE else _round_up(N, _SUBLANE)
    Np = _round_up(N, tb)
    if Np != N:
        x_bf = jnp.pad(x_bf, ((0, Np - N), (0, 0)))

    # Hidden-dim split: second "parallel" axis (keeps both v7x TCs busy) and
    # halves the W1 slice each core streams.
    dh_blk = _LANE if (Dh % _LANE == 0 and Dh > _LANE) else Dh
    n_dh = Dh // dh_blk

    tk = _pick_k_tile(K, dh_blk)
    nk = K // tk

    grid = (Np // tb, n_dh, nk)

    vmem_limit = int(
        min(48 << 20, max(8 << 20, 2 * _estimate_vmem_bytes(tb, tk, dh_blk, Do)))
    )

    partials = pl.pallas_call(
        head_kernel,
        out_shape=jax.ShapeDtypeStruct((n_dh, Np, Do), jnp.float32),
        grid=grid,
        in_specs=[
            pl.BlockSpec((tb, tk), lambda b, h, k: (b, k)),       # x K-tile
            pl.BlockSpec((tk, dh_blk), lambda b, h, k: (k, h)),   # W1 tile
            pl.BlockSpec((1, dh_blk), lambda b, h, k: (0, h)),    # b1 slice
            pl.BlockSpec((dh_blk, Do), lambda b, h, k: (h, 0)),   # W2 slice
        ],
        out_specs=pl.BlockSpec((1, tb, Do), lambda b, h, k: (h, b, 0)),
        scratch_shapes=[pltpu.VMEM((tb, dh_blk), jnp.float32)],
        compiler_params=pltpu.CompilerParams(
            dimension_semantics=("parallel", "parallel", "arbitrary"),
            vmem_limit_bytes=vmem_limit,
        ),
    )(x_bf, w1_bf, b1.reshape(1, -1), w2)

    # Sum the per-hidden-slice partials, add the final bias, drop batch padding.
    return (partials.sum(axis=0) + b2)[:N].astype(x.dtype)


if __name__ == "__main__":
    # Small shapes consistent with the module: Linear in_features = C * 32 * 32.
    N, C, H, W = 2, 4, 32, 32          # batch=2, in_out_channels=4 (small)
    D_HID, D_OUT = 256, 10
    K = C * H * W                      # 4096

    key = jax.random.PRNGKey(0)
    kx, kw1, kb1, kw2, kb2 = jax.random.split(key, 5)

    x = jax.random.normal(kx, (N, C, H, W), dtype=jnp.float32)

    # Synthetic parameters in (in, out) layout (== transposed torch Linear weights).
    w1 = jax.random.normal(kw1, (K, D_HID), dtype=jnp.float32) * 0.02
    b1 = jax.random.normal(kb1, (D_HID,), dtype=jnp.float32) * 0.1
    w2 = jax.random.normal(kw2, (D_HID, D_OUT), dtype=jnp.float32) * 0.05
    b2 = jax.random.normal(kb2, (D_OUT,), dtype=jnp.float32) * 0.1

    out = jax.block_until_ready(head_forward(x, w1, b1, w2, b2))

    # Plain-JAX reference mirroring the module (eval mode); inputs quantized to
    # bf16 exactly as the kernel streams them, all math in f32.
    x_q = x.astype(jnp.bfloat16).astype(jnp.float32).reshape(N, -1)
    w1_q = w1.astype(jnp.bfloat16).astype(jnp.float32)
    hidden_ref = jnp.maximum(x_q @ w1_q + b1, 0.0)
    ref = jax.block_until_ready(hidden_ref @ w2 + b2)

    np.testing.assert_allclose(np.asarray(out), np.asarray(ref), rtol=1e-2, atol=1e-2)
    print("KERNEL_OK")
</pallas_src>

<mosaic_0001>
module attributes {stable_mosaic.version = 11 : i64} {
  func.func @head_kernel(%arg0: i32, %arg1: i32, %arg2: i32, %arg3: memref<8x2048xbf16, #tpu.memory_space<vmem>>, %arg4: memref<2048x128xbf16, #tpu.memory_space<vmem>>, %arg5: memref<1x128xf32, #tpu.memory_space<vmem>>, %arg6: memref<128x10xf32, #tpu.memory_space<vmem>>, %arg7: memref<1x8x10xf32, #tpu.memory_space<vmem>>, %arg8: memref<8x128xf32, #tpu.memory_space<vmem>>) attributes {dimension_semantics = [#tpu.dimension_semantics<parallel>, #tpu.dimension_semantics<parallel>, #tpu.dimension_semantics<arbitrary>], iteration_bounds = array<i64: 1, 2, 2>, scalar_prefetch = 0 : i64, scratch_operands = 1 : i64, tpu.core_type = #tpu.core_type<tc>, window_params = [{transform_indices = @transform_0, window_bounds = array<i64: 8, 2048>}, {transform_indices = @transform_1, window_bounds = array<i64: 2048, 128>}, {transform_indices = @transform_2, window_bounds = array<i64: 1, 128>}, {transform_indices = @transform_3, window_bounds = array<i64: 128, 10>}, {transform_indices = @transform_4, window_bounds = array<i64: 1, 8, 10>}]} {
    %c0_i32 = arith.constant 0 : i32
    %0 = arith.cmpi eq, %arg2, %c0_i32 : i32
    %1 = arith.extui %0 : i1 to i32
    %c0_i32_0 = arith.constant 0 : i32
    %2 = arith.cmpi ne, %1, %c0_i32_0 : i32
    scf.if %2 {
      %cst_9 = arith.constant 0.000000e+00 : f32
      %12 = vector.broadcast %cst_9 : f32 to vector<8x128xf32>
      %c0_10 = arith.constant 0 : index
      %c0_11 = arith.constant 0 : index
      %13 = vector.load %arg8[%c0_10, %c0_11] : memref<8x128xf32, #tpu.memory_space<vmem>>, vector<8x128xf32>
      tpu.vector_store %arg8[%c0_10, %c0_11], %12 {strides = array<i32>} : memref<8x128xf32, #tpu.memory_space<vmem>>, vector<8x128xf32>,
    } else {
    }
    %c0 = arith.constant 0 : index
    %c0_1 = arith.constant 0 : index
    %3 = vector.load %arg8[%c0, %c0_1] : memref<8x128xf32, #tpu.memory_space<vmem>>, vector<8x128xf32>
    %c0_2 = arith.constant 0 : index
    %c0_3 = arith.constant 0 : index
    %4 = vector.load %arg3[%c0_2, %c0_3] : memref<8x2048xbf16, #tpu.memory_space<vmem>>, vector<8x2048xbf16>
    %c0_4 = arith.constant 0 : index
    %c0_5 = arith.constant 0 : index
    %5 = vector.load %arg4[%c0_4, %c0_5] : memref<2048x128xbf16, #tpu.memory_space<vmem>>, vector<2048x128xbf16>
    %cst = arith.constant dense<0.000000e+00> : vector<8x128xf32>
    %6 = tpu.matmul %4, %5, %cst {dimension_numbers = #tpu.dot_dimension_numbers<[1], [0], [0], [1], [0, 0, 1, 1], [], []>} : vector<8x2048xbf16>, vector<2048x128xbf16>, vector<8x128xf32> -> vector<8x128xf32>
    %7 = arith.addf %3, %6 : vector<8x128xf32>
    %c0_6 = arith.constant 0 : index
    %c0_7 = arith.constant 0 : index
    %8 = vector.load %arg8[%c0_6, %c0_7] : memref<8x128xf32, #tpu.memory_space<vmem>>, vector<8x128xf32>
    tpu.vector_store %arg8[%c0_6, %c0_7], %7 {strides = array<i32>} : memref<8x128xf32, #tpu.memory_space<vmem>>, vector<8x128xf32>,
    %c1_i32 = arith.constant 1 : i32
    %9 = arith.cmpi eq, %arg2, %c1_i32 : i32
    %10 = arith.extui %9 : i1 to i32
    %c0_i32_8 = arith.constant 0 : i32
    %11 = arith.cmpi ne, %10, %c0_i32_8 : i32
    scf.if %11 {
      %c0_9 = arith.constant 0 : index
      %c0_10 = arith.constant 0 : index
      %12 = vector.load %arg8[%c0_9, %c0_10] : memref<8x128xf32, #tpu.memory_space<vmem>>, vector<8x128xf32>
      %c0_11 = arith.constant 0 : index
      %c0_12 = arith.constant 0 : index
      %13 = vector.load %arg5[%c0_11, %c0_12] : memref<1x128xf32, #tpu.memory_space<vmem>>, vector<1x128xf32>
      %14 = vector.shape_cast %13 : vector<1x128xf32> to vector<128xf32>
      %15 = vector.shape_cast %14 : vector<128xf32> to vector<1x128xf32>
      %16 = vector.broadcast %15 : vector<1x128xf32> to vector<8x128xf32>
      %17 = arith.addf %12, %16 : vector<8x128xf32>
      %cst_13 = arith.constant 0.000000e+00 : f32
      %18 = vector.broadcast %cst_13 : f32 to vector<8x128xf32>
      %19 = arith.maximumf %17, %18 : vector<8x128xf32>
      %c0_14 = arith.constant 0 : index
      %c0_15 = arith.constant 0 : index
      %20 = vector.load %arg6[%c0_14, %c0_15] : memref<128x10xf32, #tpu.memory_space<vmem>>, vector<128x10xf32>
      %cst_16 = arith.constant dense<0.000000e+00> : vector<8x10xf32>
      %21 = tpu.matmul %19, %20, %cst_16 {dimension_numbers = #tpu.dot_dimension_numbers<[1], [0], [0], [1], [0, 0, 1, 1], [], []>} : vector<8x128xf32>, vector<128x10xf32>, vector<8x10xf32> -> vector<8x10xf32>
      %c0_17 = arith.constant 0 : index
      %c0_18 = arith.constant 0 : index
      %c0_19 = arith.constant 0 : index
      %22 = vector.load %arg7[%c0_17, %c0_18, %c0_19] : memref<1x8x10xf32, #tpu.memory_space<vmem>>, vector<1x8x10xf32>
      %23 = vector.shape_cast %22 : vector<1x8x10xf32> to vector<8x10xf32>
      %24 = vector.shape_cast %21 : vector<8x10xf32> to vector<1x8x10xf32>
      tpu.vector_store %arg7[%c0_17, %c0_18, %c0_19], %24 {strides = array<i32>} : memref<1x8x10xf32, #tpu.memory_space<vmem>>, vector<1x8x10xf32>,
    } else {
    }
    return
  }
  func.func @transform_0(%arg0: i32, %arg1: i32, %arg2: i32) -> (i32, i32) {
    %c0_i32 = arith.constant 0 : i32
    return %arg0, %arg2 : i32, i32
  }
  func.func @transform_1(%arg0: i32, %arg1: i32, %arg2: i32) -> (i32, i32) {
    %c0_i32 = arith.constant 0 : i32
    return %arg2, %arg1 : i32, i32
  }
  func.func @transform_2(%arg0: i32, %arg1: i32, %arg2: i32) -> (i32, i32) {
    %c0_i32 = arith.constant 0 : i32
    %c0_i32_0 = arith.constant 0 : i32
    return %c0_i32, %arg1 : i32, i32
  }
  func.func @transform_3(%arg0: i32, %arg1: i32, %arg2: i32) -> (i32, i32) {
    %c0_i32 = arith.constant 0 : i32
    %c0_i32_0 = arith.constant 0 : i32
    return %arg1, %c0_i32 : i32, i32
  }
  func.func @transform_4(%arg0: i32, %arg1: i32, %arg2: i32) -> (i32, i32, i32) {
    %c0_i32 = arith.constant 0 : i32
    %c0_i32_0 = arith.constant 0 : i32
    return %arg1, %arg0, %c0_i32 : i32, i32, i32
  }
}

</mosaic_0001>

<llo_original>
// kernel: tpu_custom_call.1
$region0: #{tpu_custom_call.1}
  #allocation0 [shape = 'u32[]', space=smem, size = 0x4, offset = 0x4, fixed_abs, tag = 'smem constant byte address 0x4 - core index']
  #allocation1 [shape = 'u32[144,128]{1,0:T(1,128)}', space=vmem, size = 0x12000, scoped, tag = 'internal scratch']
  #allocation2 [shape = 'f32[8,128]{1,0:T(8,128)}', space=vmem, size = 0x1000, scoped, tag = 'scratch operand']
  %s0 = inlined_call_operand.hbm [shape: bf16[8,4096], index: 0, kind: input, shape index: {}]
  %s1 = inlined_call_operand.hbm [shape: bf16[4096,256], index: 1, kind: input, shape index: {}]
  %s2 = inlined_call_operand.hbm [shape: f32[1,256], index: 2, kind: input, shape index: {}]
  %s3 = inlined_call_operand.vmem [shape: f32[256,10], index: 3, kind: input, shape index: {}]
  %s4 = inlined_call_operand.hbm [shape: f32[2,8,10], index: 4, kind: output, shape index: {}]
  %s5 = sld [smem:[#allocation0]]
  $region69: #{tpu_custom_call.1} parent=0
    _
  %s7 = ssub.s32 1, %s5
  %s8 = scalar_select 0, %s7, %s5
  $region1: #{tpu_custom_call.1} parent=0
    #allocation3 [shape = 'u8[65536]{0}', space=vmem, size = 0x10000, scoped, tag = 'input window, operand 0']
    #allocation4 [shape = 's32[2]{0}', space=sflag, size = 0x8, scoped, tag = 'scoped memory for tpu_custom_call.1']
    #allocation5 [shape = 's32[2]{0}', space=sflag, size = 0x8, scoped, tag = 'scoped memory for tpu_custom_call.1']
    #allocation6 [shape = 'u8[1048576]{0}', space=vmem, size = 0x100000, scoped, tag = 'input window, operand 1']
    #allocation7 [shape = 's32[2]{0}', space=sflag, size = 0x8, scoped, tag = 'scoped memory for tpu_custom_call.1']
    #allocation8 [shape = 'u8[1024]{0}', space=vmem, size = 0x400, scoped, tag = 'input window, operand 2']
    #allocation9 [shape = 'u8[8192]{0}', space=vmem, size = 0x2000, scoped, tag = 'output window, operand 0']
    %9 = vsyncpa [#allocation4], 0
    %s10 = scalar_lea.sflag [#allocation4], 1
    %11 = vsyncpa %s10, 0
    %12 = vsyncpa [#allocation7], 0
    %s13 = scalar_lea.sflag [#allocation7], 1
    %14 = vsyncpa %s13, 0
    %15 = vsyncpa [#allocation5], 0
    %s16 = scalar_lea.sflag [#allocation5], 1
    %17 = vsyncpa %s16, 0
    loop: start=0, step=1, limit=6
    $region2: #{tpu_custom_call.1} parent=1 // loop_pre_header
      _
    $region3: #{tpu_custom_call.1} parent=1 // loop_header
      %s19 = sphi 0, %s23
      %p20 = scmp.ge.s32.totalorder %s19, 6
      %s26 = sphi 0, %s45
      %s27 = sphi 0, %s41
      %s28 = sphi 0, %s37
      %s29 = sphi 0, %s26
      %s30 = sphi 0, %s27
      %s31 = sphi 0, %s28
      %s32 = sphi 0, %s29
      %s33 = sphi 0, %s30
      %s34 = sphi 0, %s31
      %s50 = sphi 0, %s52
      %s53 = sphi 0, %s50
      %s54 = sphi 0, %s53
      %s70 = sphi 0, %s54
      %s78 = sphi 0, %s80
      %s81 = sphi 0, %s78
      %s82 = sphi 0, %s81
      %s98 = sphi 0, %s82
      %s104 = sphi 0, %s106
      %s107 = sphi 0, %s104
      %s108 = sphi 0, %s107
      %s124 = sphi 0, %s108
      %s130 = sphi 0, %s132
      %s133 = sphi 0, %s130
      %s134 = sphi 0, %s133
      %s150 = sphi 0, %s134
      %s158 = sphi 0, %s160
      %s161 = sphi 0, %s158
      %s162 = sphi 0, %s161
      %s178 = sphi 0, %s162
    $region4: #{tpu_custom_call.1} parent=1 // loop_header_branch
      %22 = sbr.rel (%p20) target = $region8
    $region5: #{tpu_custom_call.1} parent=1 // loop_body
      %s24 = ssub.s32 %s19, 1
      %s25 = ssub.s32 %s19, 2
      %s35 = sadd.s32 1, %s28
      %p36 = scmp.ge.s32.totalorder %s35, 2
      %s37 = scalar_select %p36, 0, %s35
      %s38 = sadd.s32 1, %s27
      %s39 = scalar_select %p36, %s38, %s27
      %p40 = scmp.ge.s32.totalorder %s39, 2
      %s41 = scalar_select %p40, 0, %s39
      %s42 = sadd.s32 1, %s26
      %s43 = scalar_select %p40, %s42, %s26
      %p44 = scmp.ge.s32.totalorder %s43, 1
      %s45 = scalar_select %p44, 0, %s43
      %s46 = ssub.s32 %s26, %s45
      %s47 = ssub.s32 %s28, %s37
      %s48 = sor.u32 %s46, %s47
      %p49 = scmp.eq.s32.totalorder %s48, 0
      %s51 = sadd.s32 %s50, 1
      %s52 = scalar_select %p49, %s50, %s51
      %p55 = pneg %p49
      %p56 = scmp.eq.s32.totalorder %s19, 3
      %p57 = por %p55, %p56
      %p58 = scmp.ne.s32.totalorder %s50, %s53
      %p59 = scmp.eq.s32.totalorder %s19, 0
      %p60 = por %p58, %p59
      %p61 = scmp.ne.s32.totalorder %s50, %s53
      %p62 = scmp.eq.s32.totalorder %s24, 3
      %p63 = por %p61, %p62
      %p64 = scmp.ne.s32.totalorder %s53, %s54
      %p65 = scmp.eq.s32.totalorder %s24, 0
      %p66 = por %p64, %p65
      %p67 = scmp.ne.s32.totalorder %s53, %s54
      %p68 = scmp.eq.s32.totalorder %s25, 3
      %p69 = por %p67, %p68
      %p71 = scmp.ne.s32.totalorder %s54, %s70
      %p72 = scmp.eq.s32.totalorder %s25, 0
      %p73 = por %p71, %p72
      %s74 = ssub.s32 %s28, %s37
      %s75 = ssub.s32 %s27, %s41
      %s76 = sor.u32 %s74, %s75
      %p77 = scmp.eq.s32.totalorder %s76, 0
      %s79 = sadd.s32 %s78, 1
      %s80 = scalar_select %p77, %s78, %s79
      %p83 = pneg %p77
      %p84 = scmp.eq.s32.totalorder %s19, 3
      %p85 = por %p83, %p84
      %p86 = scmp.ne.s32.totalorder %s78, %s81
      %p87 = scmp.eq.s32.totalorder %s19, 0
      %p88 = por %p86, %p87
      %p89 = scmp.ne.s32.totalorder %s78, %s81
      %p90 = scmp.eq.s32.totalorder %s24, 3
      %p91 = por %p89, %p90
      %p92 = scmp.ne.s32.totalorder %s81, %s82
      %p93 = scmp.eq.s32.totalorder %s24, 0
      %p94 = por %p92, %p93
      %p95 = scmp.ne.s32.totalorder %s81, %s82
      %p96 = scmp.eq.s32.totalorder %s25, 3
      %p97 = por %p95, %p96
      %p99 = scmp.ne.s32.totalorder %s82, %s98
      %p100 = scmp.eq.s32.totalorder %s25, 0
      %p101 = por %p99, %p100
      %s102 = ssub.s32 %s27, %s41
      %p103 = scmp.eq.s32.totalorder %s102, 0
      %s105 = sadd.s32 %s104, 1
      %s106 = scalar_select %p103, %s104, %s105
      %p109 = pneg %p103
      %p110 = scmp.eq.s32.totalorder %s19, 3
      %p111 = por %p109, %p110
      %p112 = scmp.ne.s32.totalorder %s104, %s107
      %p113 = scmp.eq.s32.totalorder %s19, 0
      %p114 = por %p112, %p113
      %p115 = scmp.ne.s32.totalorder %s104, %s107
      %p116 = scmp.eq.s32.totalorder %s24, 3
      %p117 = por %p115, %p116
      %p118 = scmp.ne.s32.totalorder %s107, %s108
      %p119 = scmp.eq.s32.totalorder %s24, 0
      %p120 = por %p118, %p119
      %p121 = scmp.ne.s32.totalorder %s107, %s108
      %p122 = scmp.eq.s32.totalorder %s25, 3
      %p123 = por %p121, %p122
      %p125 = scmp.ne.s32.totalorder %s108, %s124
      %p126 = scmp.eq.s32.totalorder %s25, 0
      %p127 = por %p125, %p126
      %s128 = ssub.s32 %s27, %s41
      %p129 = scmp.eq.s32.totalorder %s128, 0
      %s131 = sadd.s32 %s130, 1
      %s132 = scalar_select %p129, %s130, %s131
      %p135 = pneg %p129
      %p136 = scmp.eq.s32.totalorder %s19, 3
      %p137 = por %p135, %p136
      %p138 = scmp.ne.s32.totalorder %s130, %s133
      %p139 = scmp.eq.s32.totalorder %s19, 0
      %p140 = por %p138, %p139
      %p141 = scmp.ne.s32.totalorder %s130, %s133
      %p142 = scmp.eq.s32.totalorder %s24, 3
      %p143 = por %p141, %p142
      %p144 = scmp.ne.s32.totalorder %s133, %s134
      %p145 = scmp.eq.s32.totalorder %s24, 0
      %p146 = por %p144, %p145
      %p147 = scmp.ne.s32.totalorder %s133, %s134
      %p148 = scmp.eq.s32.totalorder %s25, 3
      %p149 = por %p147, %p148
      %p151 = scmp.ne.s32.totalorder %s134, %s150
      %p152 = scmp.eq.s32.totalorder %s25, 0
      %p153 = por %p151, %p152
      %s154 = ssub.s32 %s27, %s41
      %s155 = ssub.s32 %s26, %s45
      %s156 = sor.u32 %s154, %s155
      %p157 = scmp.eq.s32.totalorder %s156, 0
      %s159 = sadd.s32 %s158, 1
      %s160 = scalar_select %p157, %s158, %s159
      %p163 = pneg %p157
      %p164 = scmp.eq.s32.totalorder %s19, 3
      %p165 = por %p163, %p164
      %p166 = scmp.ne.s32.totalorder %s158, %s161
      %p167 = scmp.eq.s32.totalorder %s19, 0
      %p168 = por %p166, %p167
      %p169 = scmp.ne.s32.totalorder %s158, %s161
      %p170 = scmp.eq.s32.totalorder %s24, 3
      %p171 = por %p169, %p170
      %p172 = scmp.ne.s32.totalorder %s161, %s162
      %p173 = scmp.eq.s32.totalorder %s24, 0
      %p174 = por %p172, %p173
      %p175 = scmp.ne.s32.totalorder %s161, %s162
      %p176 = scmp.eq.s32.totalorder %s25, 3
      %p177 = por %p175, %p176
      %p179 = scmp.ne.s32.totalorder %s162, %s178
      %p180 = scmp.eq.s32.totalorder %s25, 0
      %p181 = por %p179, %p180
      %p182 = scmp.le.s32.totalorder 1, %s19
      %p183 = scmp.lt.s32.totalorder %s19, 5
      %p184 = pnand %p182, %p183
      %p185 = pneg %p184
      // Predicated region
      $region9: #{tpu_custom_call.1} parent=5 // pred_check
        _
      $region10: #{tpu_custom_call.1} parent=5 // pred_check_branch
        %187 = sbr.rel (%p184) target = $region12
      $region11: #{tpu_custom_call.1} parent=5 // pred_region
        %s188 = ssub.s32 %s19, 1
      $region12: #{tpu_custom_call.1} parent=5 // pred_fallthru
        _
      %p189 = scmp.lt.s32.totalorder %s19, 4
      // Predicated region
      $region13: #{tpu_custom_call.1} parent=5 // pred_check
        %p190 = pneg %p189
      $region14: #{tpu_custom_call.1} parent=5 // pred_check_branch
        %192 = sbr.rel (%p190) target = $region16
      $region15: #{tpu_custom_call.1} parent=5 // pred_region
        // Predicated region
        $region17: #{tpu_custom_call.1} parent=15 // pred_check
          %p193 = pneg %p60
        $region18: #{tpu_custom_call.1} parent=15 // pred_check_branch
          %195 = sbr.rel (%p193) target = $region20
        $region19: #{tpu_custom_call.1} parent=15 // pred_region
          %s196 = sand.u32 %s50, 1
          %s197 = scalar_lea.sflag [#allocation4], %s196
          %s198 = sand.u32 %s50, 1
          %s199 = smul.addr %s198, 64
          %s200 = scalar_lea.vmem [#allocation3], %s199
          %s201 = smul.u32 16, %s28
          %s203 = ssub.s32 1024, 1024
          %204 = vsyncadd %s197, %s203
          %s205 = smul.addr %s26, 32
          %s206 = sadd.s32 %s201, %s205
          %s207 = smul.addr %s206, 64
          %s208 = scalar_lea.hbm %s0, %s207
          %s210 = sshll.u32 %s200, 4
          %s211 = int_to_ptr.vmem [resolvable:$true] %s210
          %213 = dma.hbm_to_vmem [thread:$0]  %s208, 1024, %s211, %s197
        $region20: #{tpu_custom_call.1} parent=15 // pred_fallthru
          _
        // Predicated region
        $region21: #{tpu_custom_call.1} parent=15 // pred_check
          %p214 = pneg %p88
        $region22: #{tpu_custom_call.1} parent=15 // pred_check_branch
          %216 = sbr.rel (%p214) target = $region24
        $region23: #{tpu_custom_call.1} parent=15 // pred_region
          %s217 = sand.u32 %s19, 1
          %s218 = scalar_lea.sflag [#allocation7], %s217
          %s219 = sand.u32 %s78, 1
          %s220 = smul.addr %s219, 1024
          %s221 = scalar_lea.vmem [#allocation6], %s220
          %s222 = smul.u32 256, %s28
          %s224 = ssub.s32 16384, 16384
          %225 = vsyncadd %s218, %s224
          %s226 = smul.addr %s222, 2
          %s227 = sadd.s32 %s27, %s226
          %s228 = smul.addr %s227, 64
          %s229 = scalar_lea.hbm %s1, %s228
          %s230 = sshll.u32 %s221, 4
          %s231 = int_to_ptr.vmem [resolvable:$true] %s230
          %236 = dma.hbm_to_vmem [thread:$0]  %s229, 16384, %s231, %s218, 128, 64, 4
        $region24: #{tpu_custom_call.1} parent=15 // pred_fallthru
          _
        // Predicated region
        $region25: #{tpu_custom_call.1} parent=15 // pred_check
          %p237 = pneg %p114
        $region26: #{tpu_custom_call.1} parent=15 // pred_check_branch
          %239 = sbr.rel (%p237) target = $region28
        $region27: #{tpu_custom_call.1} parent=15 // pred_region
          %s240 = sand.u32 %s19, 1
          %s241 = scalar_lea.sflag [#allocation7], %s240
          %s242 = sand.u32 %s104, 1
          %s243 = scalar_lea.vmem [#allocation8], %s242
          %s245 = ssub.s32 16, 16
          %246 = vsyncadd %s241, %s245
          %s247 = smul.addr %s27, 16
          %s248 = scalar_lea.hbm %s2, %s247
          %s250 = sshll.u32 %s243, 4
          %s251 = int_to_ptr.vmem [resolvable:$true] %s250
          %253 = dma.hbm_to_vmem [thread:$0]  %s248, 16, %s251, %s241
        $region28: #{tpu_custom_call.1} parent=15 // pred_fallthru
          _
        // Predicated region
        $region29: #{tpu_custom_call.1} parent=15 // pred_check
          %p254 = pneg %p140
        $region30: #{tpu_custom_call.1} parent=15 // pred_check_branch
          %256 = sbr.rel (%p254) target = $region32
        $region31: #{tpu_custom_call.1} parent=15 // pred_region
          %s257 = smul.u32 16, %s27
          %p258 = scmp.lt.s32.totalorder %s257, 31
          %s259 = scalar_select %p258, %s257, 31
          %s260 = smul.addr %s259, 8
          %s261 = scalar_lea.vmem %s3, %s260
          %s262 = smul.u32 16, %s27
        $region32: #{tpu_custom_call.1} parent=15 // pred_fallthru
          _
      $region16: #{tpu_custom_call.1} parent=5 // pred_fallthru
        _
      %p263 = scmp.le.s32.totalorder 1, %s19
      %p264 = scmp.lt.s32.totalorder %s19, 5
      %p265 = pnand %p263, %p264
      %p266 = pneg %p265
      // Predicated region
      $region33: #{tpu_custom_call.1} parent=5 // pred_check
        _
      $region34: #{tpu_custom_call.1} parent=5 // pred_check_branch
        %268 = sbr.rel (%p265) target = $region36
      $region35: #{tpu_custom_call.1} parent=5 // pred_region
        %s269 = ssub.s32 %s19, 1
        %s270 = sand.u32 %s53, 1
        %s271 = scalar_lea.sflag [#allocation4], %s270
        %s272 = sand.u32 %s53, 1
        %s273 = smul.addr %s272, 64
        %s274 = scalar_lea.vmem [#allocation3], %s273
        // Predicated region
        $region37: #{tpu_custom_call.1} parent=35 // pred_check
          %p275 = pneg %p66
        $region38: #{tpu_custom_call.1} parent=35 // pred_check_branch
          %277 = sbr.rel (%p275) target = $region40
        $region39: #{tpu_custom_call.1} parent=35 // pred_region
          %278 = dma.done %s271, 1024
        $region40: #{tpu_custom_call.1} parent=35 // pred_fallthru
          _
        %s279 = sand.u32 %s24, 1
        %s280 = scalar_lea.sflag [#allocation7], %s279
        %s281 = sand.u32 %s81, 1
        %s282 = smul.addr %s281, 1024
        %s283 = scalar_lea.vmem [#allocation6], %s282
        // Predicated region
        $region41: #{tpu_custom_call.1} parent=35 // pred_check
          %p284 = pneg %p94
        $region42: #{tpu_custom_call.1} parent=35 // pred_check_branch
          %286 = sbr.rel (%p284) target = $region44
        $region43: #{tpu_custom_call.1} parent=35 // pred_region
          %287 = dma.done %s280, 16384
        $region44: #{tpu_custom_call.1} parent=35 // pred_fallthru
          _
        %s288 = sand.u32 %s24, 1
        %s289 = scalar_lea.sflag [#allocation7], %s288
        %s290 = sand.u32 %s107, 1
        %s291 = scalar_lea.vmem [#allocation8], %s290
        // Predicated region
        $region45: #{tpu_custom_call.1} parent=35 // pred_check
          %p292 = pneg %p120
        $region46: #{tpu_custom_call.1} parent=35 // pred_check_branch
          %294 = sbr.rel (%p292) target = $region48
        $region47: #{tpu_custom_call.1} parent=35 // pred_region
          %295 = dma.done %s289, 16
        $region48: #{tpu_custom_call.1} parent=35 // pred_fallthru
          _
        %s296 = sand.u32 %s53, 1
        %s297 = scalar_lea.sflag [#allocation4], %s296
        %s298 = sand.u32 %s53, 1
        %s299 = smul.addr %s298, 64
        %s300 = scalar_lea.vmem [#allocation3], %s299
        %p301 = pneg %p66
        %p302 = pneg %p63
        %s303 = sand.u32 %s24, 1
        %s304 = scalar_lea.sflag [#allocation7], %s303
        %s305 = sand.u32 %s81, 1
        %s306 = smul.addr %s305, 1024
        %s307 = scalar_lea.vmem [#allocation6], %s306
        %p308 = pneg %p94
        %p309 = pneg %p91
        %s310 = sand.u32 %s24, 1
        %s311 = scalar_lea.sflag [#allocation7], %s310
        %s312 = sand.u32 %s107, 1
        %s313 = scalar_lea.vmem [#allocation8], %s312
        %p314 = pneg %p120
        %p315 = pneg %p117
        %s316 = smul.u32 16, %s30
        %p317 = scmp.lt.s32.totalorder %s316, 31
        %s318 = scalar_select %p317, %s316, 31
        %s319 = smul.addr %s318, 8
        %s320 = scalar_lea.vmem %s3, %s319
        %p321 = pneg %p146
        %p322 = pneg %p143
        %p323 = pneg %p174
        %p324 = pneg %p171
        %s325 = sand.u32 %s161, 1
        %s326 = scalar_lea.sflag [#allocation5], %s325
        %s327 = sand.u32 %s161, 1
        %s328 = smul.addr %s327, 8
        %s329 = scalar_lea.vmem [#allocation9], %s328
        %s330 = smul.u32 16, %s31
        %s331 = smul.u32 256, %s31
        %s332 = smul.u32 16, %s30
        %p333 = scmp.lt.s32.totalorder %s332, 31
        %s334 = scalar_select %p333, %s332, 31
        %s335 = smul.addr %s334, 8
        %s336 = scalar_lea.vmem %s3, %s335
        %s337 = smul.u32 16, %s30
        %p339 = scmp.eq.s32.totalorder %s31, 0
        // Predicated region
        $region49: #{tpu_custom_call.1} parent=35 // pred_check
          %p340 = pneg %p339
        $region50: #{tpu_custom_call.1} parent=35 // pred_check_branch
          %342 = sbr.rel (%p340) target = $region52
        $region51: #{tpu_custom_call.1} parent=35 // pred_region
          %343 = vst [vmem:[#allocation2] sm:$0xff] 0.0
        $region52: #{tpu_custom_call.1} parent=35 // pred_fallthru
          _
        %v344 = vld [vmem:[#allocation2] sm:$0xff]
        %v345 = vld [vmem:[%s274] sm:$0xff]
        %v346 = vld [vmem:[%s274 + $0x8] sm:$0xff]
        %v347 = vld [vmem:[%s274 + $0x10] sm:$0xff]
        %v348 = vld [vmem:[%s274 + $0x18] sm:$0xff]
        %v349 = vld [vmem:[%s274 + $0x20] sm:$0xff]
        %v350 = vld [vmem:[%s274 + $0x28] sm:$0xff]
        %v351 = vld [vmem:[%s274 + $0x30] sm:$0xff]
        %v352 = vld [vmem:[%s274 + $0x38] sm:$0xff]
        %v353 = vld [vmem:[%s283] sm:$0xf]
        %v354 = vld [vmem:[%s283 + $0x4] sm:$0xf]
        %v355 = vld [vmem:[%s283 + $0x8] sm:$0xf]
        %v356 = vld [vmem:[%s283 + $0xc] sm:$0xf]
        %v357 = vld [vmem:[%s283 + $0x10] sm:$0xf]
        %v358 = vld [vmem:[%s283 + $0x14] sm:$0xf]
        %v359 = vld [vmem:[%s283 + $0x18] sm:$0xf]
        %v360 = vld [vmem:[%s283 + $0x1c] sm:$0xf]
        %v361 = vld [vmem:[%s283 + $0x20] sm:$0xf]
        %v362 = vld [vmem:[%s283 + $0x24] sm:$0xf]
        %v363 = vld [vmem:[%s283 + $0x28] sm:$0xf]
        %v364 = vld [vmem:[%s283 + $0x2c] sm:$0xf]
        %v365 = vld [vmem:[%s283 + $0x30] sm:$0xf]
        %v366 = vld [vmem:[%s283 + $0x34] sm:$0xf]
        %v367 = vld [vmem:[%s283 + $0x38] sm:$0xf]
        %v368 = vld [vmem:[%s283 + $0x3c] sm:$0xf]
        %v369 = vld [vmem:[%s283 + $0x40] sm:$0xf]
        %v370 = vld [vmem:[%s283 + $0x44] sm:$0xf]
        %v371 = vld [vmem:[%s283 + $0x48] sm:$0xf]
        %v372 = vld [vmem:[%s283 + $0x4c] sm:$0xf]
        %v373 = vld [vmem:[%s283 + $0x50] sm:$0xf]
        %v374 = vld [vmem:[%s283 + $0x54] sm:$0xf]
        %v375 = vld [vmem:[%s283 + $0x58] sm:$0xf]
        %v376 = vld [vmem:[%s283 + $0x5c] sm:$0xf]
        %v377 = vld [vmem:[%s283 + $0x60] sm:$0xf]
        %v378 = vld [vmem:[%s283 + $0x64] sm:$0xf]
        %v379 = vld [vmem:[%s283 + $0x68] sm:$0xf]
        %v380 = vld [vmem:[%s283 + $0x6c] sm:$0xf]
        %v381 = vld [vmem:[%s283 + $0x70] sm:$0xf]
        %v382 = vld [vmem:[%s283 + $0x74] sm:$0xf]
        %v383 = vld [vmem:[%s283 + $0x78] sm:$0xf]
        %v384 = vld [vmem:[%s283 + $0x7c] sm:$0xf]
        %v385 = vld [vmem:[%s283 + $0x80] sm:$0xf]
        %v386 = vld [vmem:[%s283 + $0x84] sm:$0xf]
        %v387 = vld [vmem:[%s283 + $0x88] sm:$0xf]
        %v388 = vld [vmem:[%s283 + $0x8c] sm:$0xf]
        %v389 = vld [vmem:[%s283 + $0x90] sm:$0xf]
        %v390 = vld [vmem:[%s283 + $0x94] sm:$0xf]
        %v391 = vld [vmem:[%s283 + $0x98] sm:$0xf]
        %v392 = vld [vmem:[%s283 + $0x9c] sm:$0xf]
        %v393 = vld [vmem:[%s283 + $0xa0] sm:$0xf]
        %v394 = vld [vmem:[%s283 + $0xa4] sm:$0xf]
        %v395 = vld [vmem:[%s283 + $0xa8] sm:$0xf]
        %v396 = vld [vmem:[%s283 + $0xac] sm:$0xf]
        %v397 = vld [vmem:[%s283 + $0xb0] sm:$0xf]
        %v398 = vld [vmem:[%s283 + $0xb4] sm:$0xf]
        %v399 = vld [vmem:[%s283 + $0xb8] sm:$0xf]
        %v400 = vld [vmem:[%s283 + $0xbc] sm:$0xf]
        %v401 = vld [vmem:[%s283 + $0xc0] sm:$0xf]
        %v402 = vld [vmem:[%s283 + $0xc4] sm:$0xf]
        %v403 = vld [vmem:[%s283 + $0xc8] sm:$0xf]
        %v404 = vld [vmem:[%s283 + $0xcc] sm:$0xf]
        %v405 = vld [vmem:[%s283 + $0xd0] sm:$0xf]
        %v406 = vld [vmem:[%s283 + $0xd4] sm:$0xf]
        %v407 = vld [vmem:[%s283 + $0xd8] sm:$0xf]
        %v408 = vld [vmem:[%s283 + $0xdc] sm:$0xf]
        %v409 = vld [vmem:[%s283 + $0xe0] sm:$0xf]
        %v410 = vld [vmem:[%s283 + $0xe4] sm:$0xf]
        %v411 = vld [vmem:[%s283 + $0xe8] sm:$0xf]
        %v412 = vld [vmem:[%s283 + $0xec] sm:$0xf]
        %v413 = vld [vmem:[%s283 + $0xf0] sm:$0xf]
        %v414 = vld [vmem:[%s283 + $0xf4] sm:$0xf]
        %v415 = vld [vmem:[%s283 + $0xf8] sm:$0xf]
        %v416 = vld [vmem:[%s283 + $0xfc] sm:$0xf]
        %v417 = vld [vmem:[%s283 + $0x100] sm:$0xf]
        %v418 = vld [vmem:[%s283 + $0x104] sm:$0xf]
        %v419 = vld [vmem:[%s283 + $0x108] sm:$0xf]
        %v420 = vld [vmem:[%s283 + $0x10c] sm:$0xf]
        %v421 = vld [vmem:[%s283 + $0x110] sm:$0xf]
        %v422 = vld [vmem:[%s283 + $0x114] sm:$0xf]
        %v423 = vld [vmem:[%s283 + $0x118] sm:$0xf]
        %v424 = vld [vmem:[%s283 + $0x11c] sm:$0xf]
        %v425 = vld [vmem:[%s283 + $0x120] sm:$0xf]
        %v426 = vld [vmem:[%s283 + $0x124] sm:$0xf]
        %v427 = vld [vmem:[%s283 + $0x128] sm:$0xf]
        %v428 = vld [vmem:[%s283 + $0x12c] sm:$0xf]
        %v429 = vld [vmem:[%s283 + $0x130] sm:$0xf]
        %v430 = vld [vmem:[%s283 + $0x134] sm:$0xf]
        %v431 = vld [vmem:[%s283 + $0x138] sm:$0xf]
        %v432 = vld [vmem:[%s283 + $0x13c] sm:$0xf]
        %v433 = vld [vmem:[%s283 + $0x140] sm:$0xf]
        %v434 = vld [vmem:[%s283 + $0x144] sm:$0xf]
        %v435 = vld [vmem:[%s283 + $0x148] sm:$0xf]
        %v436 = vld [vmem:[%s283 + $0x14c] sm:$0xf]
        %v437 = vld [vmem:[%s283 + $0x150] sm:$0xf]
        %v438 = vld [vmem:[%s283 + $0x154] sm:$0xf]
        %v439 = vld [vmem:[%s283 + $0x158] sm:$0xf]
        %v440 = vld [vmem:[%s283 + $0x15c] sm:$0xf]
        %v441 = vld [vmem:[%s283 + $0x160] sm:$0xf]
        %v442 = vld [vmem:[%s283 + $0x164] sm:$0xf]
        %v443 = vld [vmem:[%s283 + $0x168] sm:$0xf]
        %v444 = vld [vmem:[%s283 + $0x16c] sm:$0xf]
        %v445 = vld [vmem:[%s283 + $0x170] sm:$0xf]
        %v446 = vld [vmem:[%s283 + $0x174] sm:$0xf]
        %v447 = vld [vmem:[%s283 + $0x178] sm:$0xf]
        %v448 = vld [vmem:[%s283 + $0x17c] sm:$0xf]
        %v449 = vld [vmem:[%s283 + $0x180] sm:$0xf]
        %v450 = vld [vmem:[%s283 + $0x184] sm:$0xf]
        %v451 = vld [vmem:[%s283 + $0x188] sm:$0xf]
        %v452 = vld [vmem:[%s283 + $0x18c] sm:$0xf]
        %v453 = vld [vmem:[%s283 + $0x190] sm:$0xf]
        %v454 = vld [vmem:[%s283 + $0x194] sm:$0xf]
        %v455 = vld [vmem:[%s283 + $0x198] sm:$0xf]
        %v456 = vld [vmem:[%s283 + $0x19c] sm:$0xf]
        %v457 = vld [vmem:[%s283 + $0x1a0] sm:$0xf]
        %v458 = vld [vmem:[%s283 + $0x1a4] sm:$0xf]
        %v459 = vld [vmem:[%s283 + $0x1a8] sm:$0xf]
        %v460 = vld [vmem:[%s283 + $0x1ac] sm:$0xf]
        %v461 = vld [vmem:[%s283 + $0x1b0] sm:$0xf]
        %v462 = vld [vmem:[%s283 + $0x1b4] sm:$0xf]
        %v463 = vld [vmem:[%s283 + $0x1b8] sm:$0xf]
        %v464 = vld [vmem:[%s283 + $0x1bc] sm:$0xf]
        %v465 = vld [vmem:[%s283 + $0x1c0] sm:$0xf]
        %v466 = vld [vmem:[%s283 + $0x1c4] sm:$0xf]
        %v467 = vld [vmem:[%s283 + $0x1c8] sm:$0xf]
        %v468 = vld [vmem:[%s283 + $0x1cc] sm:$0xf]
        %v469 = vld [vmem:[%s283 + $0x1d0] sm:$0xf]
        %v470 = vld [vmem:[%s283 + $0x1d4] sm:$0xf]
        %v471 = vld [vmem:[%s283 + $0x1d8] sm:$0xf]
        %v472 = vld [vmem:[%s283 + $0x1dc] sm:$0xf]
        %v473 = vld [vmem:[%s283 + $0x1e0] sm:$0xf]
        %v474 = vld [vmem:[%s283 + $0x1e4] sm:$0xf]
        %v475 = vld [vmem:[%s283 + $0x1e8] sm:$0xf]
        %v476 = vld [vmem:[%s283 + $0x1ec] sm:$0xf]
        %v477 = vld [vmem:[%s283 + $0x1f0] sm:$0xf]
        %v478 = vld [vmem:[%s283 + $0x1f4] sm:$0xf]
        %v479 = vld [vmem:[%s283 + $0x1f8] sm:$0xf]
        %v480 = vld [vmem:[%s283 + $0x1fc] sm:$0xf]
        %v481 = vld [vmem:[%s283 + $0x200] sm:$0xf]
        %v482 = vld [vmem:[%s283 + $0x204] sm:$0xf]
        %v483 = vld [vmem:[%s283 + $0x208] sm:$0xf]
        %v484 = vld [vmem:[%s283 + $0x20c] sm:$0xf]
        %v485 = vld [vmem:[%s283 + $0x210] sm:$0xf]
        %v486 = vld [vmem:[%s283 + $0x214] sm:$0xf]
        %v487 = vld [vmem:[%s283 + $0x218] sm:$0xf]
        %v488 = vld [vmem:[%s283 + $0x21c] sm:$0xf]
        %v489 = vld [vmem:[%s283 + $0x220] sm:$0xf]
        %v490 = vld [vmem:[%s283 + $0x224] sm:$0xf]
        %v491 = vld [vmem:[%s283 + $0x228] sm:$0xf]
        %v492 = vld [vmem:[%s283 + $0x22c] sm:$0xf]
        %v493 = vld [vmem:[%s283 + $0x230] sm:$0xf]
        %v494 = vld [vmem:[%s283 + $0x234] sm:$0xf]
        %v495 = vld [vmem:[%s283 + $0x238] sm:$0xf]
        %v496 = vld [vmem:[%s283 + $0x23c] sm:$0xf]
        %v497 = vld [vmem:[%s283 + $0x240] sm:$0xf]
        %v498 = vld [vmem:[%s283 + $0x244] sm:$0xf]
        %v499 = vld [vmem:[%s283 + $0x248] sm:$0xf]
        %v500 = vld [vmem:[%s283 + $0x24c] sm:$0xf]
        %v501 = vld [vmem:[%s283 + $0x250] sm:$0xf]
        %v502 = vld [vmem:[%s283 + $0x254] sm:$0xf]
        %v503 = vld [vmem:[%s283 + $0x258] sm:$0xf]
        %v504 = vld [vmem:[%s283 + $0x25c] sm:$0xf]
        %v505 = vld [vmem:[%s283 + $0x260] sm:$0xf]
        %v506 = vld [vmem:[%s283 + $0x264] sm:$0xf]
        %v507 = vld [vmem:[%s283 + $0x268] sm:$0xf]
        %v508 = vld [vmem:[%s283 + $0x26c] sm:$0xf]
        %v509 = vld [vmem:[%s283 + $0x270] sm:$0xf]
        %v510 = vld [vmem:[%s283 + $0x274] sm:$0xf]
        %v511 = vld [vmem:[%s283 + $0x278] sm:$0xf]
        %v512 = vld [vmem:[%s283 + $0x27c] sm:$0xf]
        %v513 = vld [vmem:[%s283 + $0x280] sm:$0xf]
        %v514 = vld [vmem:[%s283 + $0x284] sm:$0xf]
        %v515 = vld [vmem:[%s283 + $0x288] sm:$0xf]
        %v516 = vld [vmem:[%s283 + $0x28c] sm:$0xf]
        %v517 = vld [vmem:[%s283 + $0x290] sm:$0xf]
        %v518 = vld [vmem:[%s283 + $0x294] sm:$0xf]
        %v519 = vld [vmem:[%s283 + $0x298] sm:$0xf]
        %v520 = vld [vmem:[%s283 + $0x29c] sm:$0xf]
        %v521 = vld [vmem:[%s283 + $0x2a0] sm:$0xf]
        %v522 = vld [vmem:[%s283 + $0x2a4] sm:$0xf]
        %v523 = vld [vmem:[%s283 + $0x2a8] sm:$0xf]
        %v524 = vld [vmem:[%s283 + $0x2ac] sm:$0xf]
        %v525 = vld [vmem:[%s283 + $0x2b0] sm:$0xf]
        %v526 = vld [vmem:[%s283 + $0x2b4] sm:$0xf]
        %v527 = vld [vmem:[%s283 + $0x2b8] sm:$0xf]
        %v528 = vld [vmem:[%s283 + $0x2bc] sm:$0xf]
        %v529 = vld [vmem:[%s283 + $0x2c0] sm:$0xf]
        %v530 = vld [vmem:[%s283 + $0x2c4] sm:$0xf]
        %v531 = vld [vmem:[%s283 + $0x2c8] sm:$0xf]
        %v532 = vld [vmem:[%s283 + $0x2cc] sm:$0xf]
        %v533 = vld [vmem:[%s283 + $0x2d0] sm:$0xf]
        %v534 = vld [vmem:[%s283 + $0x2d4] sm:$0xf]
        %v535 = vld [vmem:[%s283 + $0x2d8] sm:$0xf]
        %v536 = vld [vmem:[%s283 + $0x2dc] sm:$0xf]
        %v537 = vld [vmem:[%s283 + $0x2e0] sm:$0xf]
        %v538 = vld [vmem:[%s283 + $0x2e4] sm:$0xf]
        %v539 = vld [vmem:[%s283 + $0x2e8] sm:$0xf]
        %v540 = vld [vmem:[%s283 + $0x2ec] sm:$0xf]
        %v541 = vld [vmem:[%s283 + $0x2f0] sm:$0xf]
        %v542 = vld [vmem:[%s283 + $0x2f4] sm:$0xf]
        %v543 = vld [vmem:[%s283 + $0x2f8] sm:$0xf]
        %v544 = vld [vmem:[%s283 + $0x2fc] sm:$0xf]
        %v545 = vld [vmem:[%s283 + $0x300] sm:$0xf]
        %v546 = vld [vmem:[%s283 + $0x304] sm:$0xf]
        %v547 = vld [vmem:[%s283 + $0x308] sm:$0xf]
        %v548 = vld [vmem:[%s283 + $0x30c] sm:$0xf]
        %v549 = vld [vmem:[%s283 + $0x310] sm:$0xf]
        %v550 = vld [vmem:[%s283 + $0x314] sm:$0xf]
        %v551 = vld [vmem:[%s283 + $0x318] sm:$0xf]
        %v552 = vld [vmem:[%s283 + $0x31c] sm:$0xf]
        %v553 = vld [vmem:[%s283 + $0x320] sm:$0xf]
        %v554 = vld [vmem:[%s283 + $0x324] sm:$0xf]
        %v555 = vld [vmem:[%s283 + $0x328] sm:$0xf]
        %v556 = vld [vmem:[%s283 + $0x32c] sm:$0xf]
        %v557 = vld [vmem:[%s283 + $0x330] sm:$0xf]
        %v558 = vld [vmem:[%s283 + $0x334] sm:$0xf]
        %v559 = vld [vmem:[%s283 + $0x338] sm:$0xf]
        %v560 = vld [vmem:[%s283 + $0x33c] sm:$0xf]
        %v561 = vld [vmem:[%s283 + $0x340] sm:$0xf]
        %v562 = vld [vmem:[%s283 + $0x344] sm:$0xf]
        %v563 = vld [vmem:[%s283 + $0x348] sm:$0xf]
        %v564 = vld [vmem:[%s283 + $0x34c] sm:$0xf]
        %v565 = vld [vmem:[%s283 + $0x350] sm:$0xf]
        %v566 = vld [vmem:[%s283 + $0x354] sm:$0xf]
        %v567 = vld [vmem:[%s283 + $0x358] sm:$0xf]
        %v568 = vld [vmem:[%s283 + $0x35c] sm:$0xf]
        %v569 = vld [vmem:[%s283 + $0x360] sm:$0xf]
        %v570 = vld [vmem:[%s283 + $0x364] sm:$0xf]
        %v571 = vld [vmem:[%s283 + $0x368] sm:$0xf]
        %v572 = vld [vmem:[%s283 + $0x36c] sm:$0xf]
        %v573 = vld [vmem:[%s283 + $0x370] sm:$0xf]
        %v574 = vld [vmem:[%s283 + $0x374] sm:$0xf]
        %v575 = vld [vmem:[%s283 + $0x378] sm:$0xf]
        %v576 = vld [vmem:[%s283 + $0x37c] sm:$0xf]
        %v577 = vld [vmem:[%s283 + $0x380] sm:$0xf]
        %v578 = vld [vmem:[%s283 + $0x384] sm:$0xf]
        %v579 = vld [vmem:[%s283 + $0x388] sm:$0xf]
        %v580 = vld [vmem:[%s283 + $0x38c] sm:$0xf]
        %v581 = vld [vmem:[%s283 + $0x390] sm:$0xf]
        %v582 = vld [vmem:[%s283 + $0x394] sm:$0xf]
        %v583 = vld [vmem:[%s283 + $0x398] sm:$0xf]
        %v584 = vld [vmem:[%s283 + $0x39c] sm:$0xf]
        %v585 = vld [vmem:[%s283 + $0x3a0] sm:$0xf]
        %v586 = vld [vmem:[%s283 + $0x3a4] sm:$0xf]
        %v587 = vld [vmem:[%s283 + $0x3a8] sm:$0xf]
        %v588 = vld [vmem:[%s283 + $0x3ac] sm:$0xf]
        %v589 = vld [vmem:[%s283 + $0x3b0] sm:$0xf]
        %v590 = vld [vmem:[%s283 + $0x3b4] sm:$0xf]
        %v591 = vld [vmem:[%s283 + $0x3b8] sm:$0xf]
        %v592 = vld [vmem:[%s283 + $0x3bc] sm:$0xf]
        %v593 = vld [vmem:[%s283 + $0x3c0] sm:$0xf]
        %v594 = vld [vmem:[%s283 + $0x3c4] sm:$0xf]
        %v595 = vld [vmem:[%s283 + $0x3c8] sm:$0xf]
        %v596 = vld [vmem:[%s283 + $0x3cc] sm:$0xf]
        %v597 = vld [vmem:[%s283 + $0x3d0] sm:$0xf]
        %v598 = vld [vmem:[%s283 + $0x3d4] sm:$0xf]
        %v599 = vld [vmem:[%s283 + $0x3d8] sm:$0xf]
        %v600 = vld [vmem:[%s283 + $0x3dc] sm:$0xf]
        %v601 = vld [vmem:[%s283 + $0x3e0] sm:$0xf]
        %v602 = vld [vmem:[%s283 + $0x3e4] sm:$0xf]
        %v603 = vld [vmem:[%s283 + $0x3e8] sm:$0xf]
        %v604 = vld [vmem:[%s283 + $0x3ec] sm:$0xf]
        %v605 = vld [vmem:[%s283 + $0x3f0] sm:$0xf]
        %v606 = vld [vmem:[%s283 + $0x3f4] sm:$0xf]
        %v607 = vld [vmem:[%s283 + $0x3f8] sm:$0xf]
        %v608 = vld [vmem:[%s283 + $0x3fc] sm:$0xf]
        %v617 = vunpack.c.l.b16 %v345
        %v618 = vunpack.c.h.b16 %v345
        %v619 = vunpack.c.l.b16 %v346
        %v620 = vunpack.c.h.b16 %v346
        %v621 = vunpack.c.l.b16 %v347
        %v622 = vunpack.c.h.b16 %v347
        %v623 = vunpack.c.l.b16 %v348
        %v624 = vunpack.c.h.b16 %v348
        %v625 = vunpack.c.l.b16 %v349
        %v626 = vunpack.c.h.b16 %v349
        %v627 = vunpack.c.l.b16 %v350
        %v628 = vunpack.c.h.b16 %v350
        %v629 = vunpack.c.l.b16 %v351
        %v630 = vunpack.c.h.b16 %v351
        %v631 = vunpack.c.l.b16 %v352
        %v632 = vunpack.c.h.b16 %v352
        %v633 = vpack.c.b16 %v617, %v617
        %v634 = vpack.c.b16 %v618, %v618
        %v635 = vpack.c.b16 %v619, %v619
        %v636 = vpack.c.b16 %v620, %v620
        %v637 = vpack.c.b16 %v621, %v621
        %v638 = vpack.c.b16 %v622, %v622
        %v639 = vpack.c.b16 %v623, %v623
        %v640 = vpack.c.b16 %v624, %v624
        %v641 = vpack.c.b16 %v625, %v625
        %v642 = vpack.c.b16 %v626, %v626
        %v643 = vpack.c.b16 %v627, %v627
        %v644 = vpack.c.b16 %v628, %v628
        %v645 = vpack.c.b16 %v629, %v629
        %v646 = vpack.c.b16 %v630, %v630
        %v647 = vpack.c.b16 %v631, %v631
        %v648 = vpack.c.b16 %v632, %v632
        %v921 = vunpack.c.l.b16 %v353
        %v922 = vunpack.c.l.b16 %v354
        %v923 = vunpack.c.l.b16 %v355
        %v924 = vunpack.c.l.b16 %v356
        %v925 = vunpack.c.l.b16 %v357
        %v926 = vunpack.c.l.b16 %v358
        %v927 = vunpack.c.l.b16 %v359
        %v928 = vunpack.c.l.b16 %v360
        %v929 = vunpack.c.l.b16 %v361
        %v930 = vunpack.c.l.b16 %v362
        %v931 = vunpack.c.l.b16 %v363
        %v932 = vunpack.c.l.b16 %v364
        %v933 = vunpack.c.l.b16 %v365
        %v934 = vunpack.c.l.b16 %v366
        %v935 = vunpack.c.l.b16 %v367
        %v936 = vunpack.c.l.b16 %v368
        %v937 = vunpack.c.l.b16 %v369
        %v938 = vunpack.c.l.b16 %v370
        %v939 = vunpack.c.l.b16 %v371
        %v940 = vunpack.c.l.b16 %v372
        %v941 = vunpack.c.l.b16 %v373
        %v942 = vunpack.c.l.b16 %v374
        %v943 = vunpack.c.l.b16 %v375
        %v944 = vunpack.c.l.b16 %v376
        %v945 = vunpack.c.l.b16 %v377
        %v946 = vunpack.c.l.b16 %v378
        %v947 = vunpack.c.l.b16 %v379
        %v948 = vunpack.c.l.b16 %v380
        %v949 = vunpack.c.l.b16 %v381
        %v950 = vunpack.c.l.b16 %v382
        %v951 = vunpack.c.l.b16 %v383
        %v952 = vunpack.c.l.b16 %v384
        %v953 = vunpack.c.l.b16 %v385
        %v954 = vunpack.c.l.b16 %v386
        %v955 = vunpack.c.l.b16 %v387
        %v956 = vunpack.c.l.b16 %v388
        %v957 = vunpack.c.l.b16 %v389
        %v958 = vunpack.c.l.b16 %v390
        %v959 = vunpack.c.l.b16 %v391
        %v960 = vunpack.c.l.b16 %v392
        %v961 = vunpack.c.l.b16 %v393
        %v962 = vunpack.c.l.b16 %v394
        %v963 = vunpack.c.l.b16 %v395
        %v964 = vunpack.c.l.b16 %v396
        %v965 = vunpack.c.l.b16 %v397
        %v966 = vunpack.c.l.b16 %v398
        %v967 = vunpack.c.l.b16 %v399
        %v968 = vunpack.c.l.b16 %v400
        %v969 = vunpack.c.l.b16 %v401
        %v970 = vunpack.c.l.b16 %v402
        %v971 = vunpack.c.l.b16 %v403
        %v972 = vunpack.c.l.b16 %v404
        %v973 = vunpack.c.l.b16 %v405
        %v974 = vunpack.c.l.b16 %v406
        %v975 = vunpack.c.l.b16 %v407
        %v976 = vunpack.c.l.b16 %v408
        %v977 = vunpack.c.l.b16 %v409
        %v978 = vunpack.c.l.b16 %v410
        %v979 = vunpack.c.l.b16 %v411
        %v980 = vunpack.c.l.b16 %v412
        %v981 = vunpack.c.l.b16 %v413
        %v982 = vunpack.c.l.b16 %v414
        %v983 = vunpack.c.l.b16 %v415
        %v984 = vunpack.c.l.b16 %v416
        %v985 = vunpack.c.l.b16 %v417
        %v986 = vunpack.c.l.b16 %v418
        %v987 = vunpack.c.l.b16 %v419
        %v988 = vunpack.c.l.b16 %v420
        %v989 = vunpack.c.l.b16 %v421
        %v990 = vunpack.c.l.b16 %v422
        %v991 = vunpack.c.l.b16 %v423
        %v992 = vunpack.c.l.b16 %v424
        %v993 = vunpack.c.l.b16 %v425
        %v994 = vunpack.c.l.b16 %v426
        %v995 = vunpack.c.l.b16 %v427
        %v996 = vunpack.c.l.b16 %v428
        %v997 = vunpack.c.l.b16 %v429
        %v998 = vunpack.c.l.b16 %v430
        %v999 = vunpack.c.l.b16 %v431
        %v1000 = vunpack.c.l.b16 %v432
        %v1001 = vunpack.c.l.b16 %v433
        %v1002 = vunpack.c.l.b16 %v434
        %v1003 = vunpack.c.l.b16 %v435
        %v1004 = vunpack.c.l.b16 %v436
        %v1005 = vunpack.c.l.b16 %v437
        %v1006 = vunpack.c.l.b16 %v438
        %v1007 = vunpack.c.l.b16 %v439
        %v1008 = vunpack.c.l.b16 %v440
        %v1009 = vunpack.c.l.b16 %v441
        %v1010 = vunpack.c.l.b16 %v442
        %v1011 = vunpack.c.l.b16 %v443
        %v1012 = vunpack.c.l.b16 %v444
        %v1013 = vunpack.c.l.b16 %v445
        %v1014 = vunpack.c.l.b16 %v446
        %v1015 = vunpack.c.l.b16 %v447
        %v1016 = vunpack.c.l.b16 %v448
        %v1017 = vunpack.c.l.b16 %v449
        %v1018 = vunpack.c.l.b16 %v450
        %v1019 = vunpack.c.l.b16 %v451
        %v1020 = vunpack.c.l.b16 %v452
        %v1021 = vunpack.c.l.b16 %v453
        %v1022 = vunpack.c.l.b16 %v454
        %v1023 = vunpack.c.l.b16 %v455
        %v1024 = vunpack.c.l.b16 %v456
        %v1025 = vunpack.c.l.b16 %v457
        %v1026 = vunpack.c.l.b16 %v458
        %v1027 = vunpack.c.l.b16 %v459
        %v1028 = vunpack.c.l.b16 %v460
        %v1029 = vunpack.c.l.b16 %v461
        %v1030 = vunpack.c.l.b16 %v462
        %v1031 = vunpack.c.l.b16 %v463
        %v1032 = vunpack.c.l.b16 %v464
        %v1033 = vunpack.c.l.b16 %v465
        %v1034 = vunpack.c.l.b16 %v466
        %v1035 = vunpack.c.l.b16 %v467
        %v1036 = vunpack.c.l.b16 %v468
        %v1037 = vunpack.c.l.b16 %v469
        %v1038 = vunpack.c.l.b16 %v470
        %v1039 = vunpack.c.l.b16 %v471
        %v1040 = vunpack.c.l.b16 %v472
        %v1041 = vunpack.c.l.b16 %v473
        %v1042 = vunpack.c.l.b16 %v474
        %v1043 = vunpack.c.l.b16 %v475
        %v1044 = vunpack.c.l.b16 %v476
        %v1045 = vunpack.c.l.b16 %v477
        %v1046 = vunpack.c.l.b16 %v478
        %v1047 = vunpack.c.l.b16 %v479
        %v1048 = vunpack.c.l.b16 %v480
        %v1049 = vunpack.c.l.b16 %v481
        %v1050 = vunpack.c.l.b16 %v482
        %v1051 = vunpack.c.l.b16 %v483
        %v1052 = vunpack.c.l.b16 %v484
        %v1053 = vunpack.c.l.b16 %v485
        %v1054 = vunpack.c.l.b16 %v486
        %v1055 = vunpack.c.l.b16 %v487
        %v1056 = vunpack.c.l.b16 %v488
        %v1057 = vunpack.c.l.b16 %v489
        %v1058 = vunpack.c.l.b16 %v490
        %v1059 = vunpack.c.l.b16 %v491
        %v1060 = vunpack.c.l.b16 %v492
        %v1061 = vunpack.c.l.b16 %v493
        %v1062 = vunpack.c.l.b16 %v494
        %v1063 = vunpack.c.l.b16 %v495
        %v1064 = vunpack.c.l.b16 %v496
        %v1065 = vunpack.c.l.b16 %v497
        %v1066 = vunpack.c.l.b16 %v498
        %v1067 = vunpack.c.l.b16 %v499
        %v1068 = vunpack.c.l.b16 %v500
        %v1069 = vunpack.c.l.b16 %v501
        %v1070 = vunpack.c.l.b16 %v502
        %v1071 = vunpack.c.l.b16 %v503
        %v1072 = vunpack.c.l.b16 %v504
        %v1073 = vunpack.c.l.b16 %v505
        %v1074 = vunpack.c.l.b16 %v506
        %v1075 = vunpack.c.l.b16 %v507
        %v1076 = vunpack.c.l.b16 %v508
        %v1077 = vunpack.c.l.b16 %v509
        %v1078 = vunpack.c.l.b16 %v510
        %v1079 = vunpack.c.l.b16 %v511
        %v1080 = vunpack.c.l.b16 %v512
        %v1081 = vunpack.c.l.b16 %v513
        %v1082 = vunpack.c.l.b16 %v514
        %v1083 = vunpack.c.l.b16 %v515
        %v1084 = vunpack.c.l.b16 %v516
        %v1085 = vunpack.c.l.b16 %v517
        %v1086 = vunpack.c.l.b16 %v518
        %v1087 = vunpack.c.l.b16 %v519
        %v1088 = vunpack.c.l.b16 %v520
        %v1089 = vunpack.c.l.b16 %v521
        %v1090 = vunpack.c.l.b16 %v522
        %v1091 = vunpack.c.l.b16 %v523
        %v1092 = vunpack.c.l.b16 %v524
        %v1093 = vunpack.c.l.b16 %v525
        %v1094 = vunpack.c.l.b16 %v526
        %v1095 = vunpack.c.l.b16 %v527
        %v1096 = vunpack.c.l.b16 %v528
        %v1097 = vunpack.c.l.b16 %v529
        %v1098 = vunpack.c.l.b16 %v530
        %v1099 = vunpack.c.l.b16 %v531
        %v1100 = vunpack.c.l.b16 %v532
        %v1101 = vunpack.c.l.b16 %v533
        %v1102 = vunpack.c.l.b16 %v534
        %v1103 = vunpack.c.l.b16 %v535
        %v1104 = vunpack.c.l.b16 %v536
        %v1105 = vunpack.c.l.b16 %v537
        %v1106 = vunpack.c.l.b16 %v538
        %v1107 = vunpack.c.l.b16 %v539
        %v1108 = vunpack.c.l.b16 %v540
        %v1109 = vunpack.c.l.b16 %v541
        %v1110 = vunpack.c.l.b16 %v542
        %v1111 = vunpack.c.l.b16 %v543
        %v1112 = vunpack.c.l.b16 %v544
        %v1113 = vunpack.c.l.b16 %v545
        %v1114 = vunpack.c.l.b16 %v546
        %v1115 = vunpack.c.l.b16 %v547
        %v1116 = vunpack.c.l.b16 %v548
        %v1117 = vunpack.c.l.b16 %v549
        %v1118 = vunpack.c.l.b16 %v550
        %v1119 = vunpack.c.l.b16 %v551
        %v1120 = vunpack.c.l.b16 %v552
        %v1121 = vunpack.c.l.b16 %v553
        %v1122 = vunpack.c.l.b16 %v554
        %v1123 = vunpack.c.l.b16 %v555
        %v1124 = vunpack.c.l.b16 %v556
        %v1125 = vunpack.c.l.b16 %v557
        %v1126 = vunpack.c.l.b16 %v558
        %v1127 = vunpack.c.l.b16 %v559
        %v1128 = vunpack.c.l.b16 %v560
        %v1129 = vunpack.c.l.b16 %v561
        %v1130 = vunpack.c.l.b16 %v562
        %v1131 = vunpack.c.l.b16 %v563
        %v1132 = vunpack.c.l.b16 %v564
        %v1133 = vunpack.c.l.b16 %v565
        %v1134 = vunpack.c.l.b16 %v566
        %v1135 = vunpack.c.l.b16 %v567
        %v1136 = vunpack.c.l.b16 %v568
        %v1137 = vunpack.c.l.b16 %v569
        %v1138 = vunpack.c.l.b16 %v570
        %v1139 = vunpack.c.l.b16 %v571
        %v1140 = vunpack.c.l.b16 %v572
        %v1141 = vunpack.c.l.b16 %v573
        %v1142 = vunpack.c.l.b16 %v574
        %v1143 = vunpack.c.l.b16 %v575
        %v1144 = vunpack.c.l.b16 %v576
        %v1145 = vunpack.c.l.b16 %v577
        %v1146 = vunpack.c.l.b16 %v578
        %v1147 = vunpack.c.l.b16 %v579
        %v1148 = vunpack.c.l.b16 %v580
        %v1149 = vunpack.c.l.b16 %v581
        %v1150 = vunpack.c.l.b16 %v582
        %v1151 = vunpack.c.l.b16 %v583
        %v1152 = vunpack.c.l.b16 %v584
        %v1153 = vunpack.c.l.b16 %v585
        %v1154 = vunpack.c.l.b16 %v586
        %v1155 = vunpack.c.l.b16 %v587
        %v1156 = vunpack.c.l.b16 %v588
        %v1157 = vunpack.c.l.b16 %v589
        %v1158 = vunpack.c.l.b16 %v590
        %v1159 = vunpack.c.l.b16 %v591
        %v1160 = vunpack.c.l.b16 %v592
        %v1161 = vunpack.c.l.b16 %v593
        %v1162 = vunpack.c.l.b16 %v594
        %v1163 = vunpack.c.l.b16 %v595
        %v1164 = vunpack.c.l.b16 %v596
        %v1165 = vunpack.c.l.b16 %v597
        %v1166 = vunpack.c.l.b16 %v598
        %v1167 = vunpack.c.l.b16 %v599
        %v1168 = vunpack.c.l.b16 %v600
        %v1169 = vunpack.c.l.b16 %v601
        %v1170 = vunpack.c.l.b16 %v602
        %v1171 = vunpack.c.l.b16 %v603
        %v1172 = vunpack.c.l.b16 %v604
        %v1173 = vunpack.c.l.b16 %v605
        %v1174 = vunpack.c.l.b16 %v606
        %v1175 = vunpack.c.l.b16 %v607
        %v1176 = vunpack.c.l.b16 %v608
        %v1177 = vpack.c.b16 %v922, %v921
        %v1178 = vpack.c.b16 %v924, %v923
        %v1179 = vpack.c.b16 %v926, %v925
        %v1180 = vpack.c.b16 %v928, %v927
        %v1181 = vpack.c.b16 %v930, %v929
        %v1182 = vpack.c.b16 %v932, %v931
        %v1183 = vpack.c.b16 %v934, %v933
        %v1184 = vpack.c.b16 %v936, %v935
        %v1185 = vpack.c.b16 %v938, %v937
        %v1186 = vpack.c.b16 %v940, %v939
        %v1187 = vpack.c.b16 %v942, %v941
        %v1188 = vpack.c.b16 %v944, %v943
        %v1189 = vpack.c.b16 %v946, %v945
        %v1190 = vpack.c.b16 %v948, %v947
        %v1191 = vpack.c.b16 %v950, %v949
        %v1192 = vpack.c.b16 %v952, %v951
        %v1193 = vpack.c.b16 %v954, %v953
        %v1194 = vpack.c.b16 %v956, %v955
        %v1195 = vpack.c.b16 %v958, %v957
        %v1196 = vpack.c.b16 %v960, %v959
        %v1197 = vpack.c.b16 %v962, %v961
        %v1198 = vpack.c.b16 %v964, %v963
        %v1199 = vpack.c.b16 %v966, %v965
        %v1200 = vpack.c.b16 %v968, %v967
        %v1201 = vpack.c.b16 %v970, %v969
        %v1202 = vpack.c.b16 %v972, %v971
        %v1203 = vpack.c.b16 %v974, %v973
        %v1204 = vpack.c.b16 %v976, %v975
        %v1205 = vpack.c.b16 %v978, %v977
        %v1206 = vpack.c.b16 %v980, %v979
        %v1207 = vpack.c.b16 %v982, %v981
        %v1208 = vpack.c.b16 %v984, %v983
        %v1209 = vpack.c.b16 %v986, %v985
        %v1210 = vpack.c.b16 %v988, %v987
        %v1211 = vpack.c.b16 %v990, %v989
        %v1212 = vpack.c.b16 %v992, %v991
        %v1213 = vpack.c.b16 %v994, %v993
        %v1214 = vpack.c.b16 %v996, %v995
        %v1215 = vpack.c.b16 %v998, %v997
        %v1216 = vpack.c.b16 %v1000, %v999
        %v1217 = vpack.c.b16 %v1002, %v1001
        %v1218 = vpack.c.b16 %v1004, %v1003
        %v1219 = vpack.c.b16 %v1006, %v1005
        %v1220 = vpack.c.b16 %v1008, %v1007
        %v1221 = vpack.c.b16 %v1010, %v1009
        %v1222 = vpack.c.b16 %v1012, %v1011
        %v1223 = vpack.c.b16 %v1014, %v1013
        %v1224 = vpack.c.b16 %v1016, %v1015
        %v1225 = vpack.c.b16 %v1018, %v1017
        %v1226 = vpack.c.b16 %v1020, %v1019
        %v1227 = vpack.c.b16 %v1022, %v1021
        %v1228 = vpack.c.b16 %v1024, %v1023
        %v1229 = vpack.c.b16 %v1026, %v1025
        %v1230 = vpack.c.b16 %v1028, %v1027
        %v1231 = vpack.c.b16 %v1030, %v1029
        %v1232 = vpack.c.b16 %v1032, %v1031
        %v1233 = vpack.c.b16 %v1034, %v1033
        %v1234 = vpack.c.b16 %v1036, %v1035
        %v1235 = vpack.c.b16 %v1038, %v1037
        %v1236 = vpack.c.b16 %v1040, %v1039
        %v1237 = vpack.c.b16 %v1042, %v1041
        %v1238 = vpack.c.b16 %v1044, %v1043
        %v1239 = vpack.c.b16 %v1046, %v1045
        %v1240 = vpack.c.b16 %v1048, %v1047
        %v1241 = vpack.c.b16 %v1050, %v1049
        %v1242 = vpack.c.b16 %v1052, %v1051
        %v1243 = vpack.c.b16 %v1054, %v1053
        %v1244 = vpack.c.b16 %v1056, %v1055
        %v1245 = vpack.c.b16 %v1058, %v1057
        %v1246 = vpack.c.b16 %v1060, %v1059
        %v1247 = vpack.c.b16 %v1062, %v1061
        %v1248 = vpack.c.b16 %v1064, %v1063
        %v1249 = vpack.c.b16 %v1066, %v1065
        %v1250 = vpack.c.b16 %v1068, %v1067
        %v1251 = vpack.c.b16 %v1070, %v1069
        %v1252 = vpack.c.b16 %v1072, %v1071
        %v1253 = vpack.c.b16 %v1074, %v1073
        %v1254 = vpack.c.b16 %v1076, %v1075
        %v1255 = vpack.c.b16 %v1078, %v1077
        %v1256 = vpack.c.b16 %v1080, %v1079
        %v1257 = vpack.c.b16 %v1082, %v1081
        %v1258 = vpack.c.b16 %v1084, %v1083
        %v1259 = vpack.c.b16 %v1086, %v1085
        %v1260 = vpack.c.b16 %v1088, %v1087
        %v1261 = vpack.c.b16 %v1090, %v1089
        %v1262 = vpack.c.b16 %v1092, %v1091
        %v1263 = vpack.c.b16 %v1094, %v1093
        %v1264 = vpack.c.b16 %v1096, %v1095
        %v1265 = vpack.c.b16 %v1098, %v1097
        %v1266 = vpack.c.b16 %v1100, %v1099
        %v1267 = vpack.c.b16 %v1102, %v1101
        %v1268 = vpack.c.b16 %v1104, %v1103
        %v1269 = vpack.c.b16 %v1106, %v1105
        %v1270 = vpack.c.b16 %v1108, %v1107
        %v1271 = vpack.c.b16 %v1110, %v1109
        %v1272 = vpack.c.b16 %v1112, %v1111
        %v1273 = vpack.c.b16 %v1114, %v1113
        %v1274 = vpack.c.b16 %v1116, %v1115
        %v1275 = vpack.c.b16 %v1118, %v1117
        %v1276 = vpack.c.b16 %v1120, %v1119
        %v1277 = vpack.c.b16 %v1122, %v1121
        %v1278 = vpack.c.b16 %v1124, %v1123
        %v1279 = vpack.c.b16 %v1126, %v1125
        %v1280 = vpack.c.b16 %v1128, %v1127
        %v1281 = vpack.c.b16 %v1130, %v1129
        %v1282 = vpack.c.b16 %v1132, %v1131
        %v1283 = vpack.c.b16 %v1134, %v1133
        %v1284 = vpack.c.b16 %v1136, %v1135
        %v1285 = vpack.c.b16 %v1138, %v1137
        %v1286 = vpack.c.b16 %v1140, %v1139
        %v1287 = vpack.c.b16 %v1142, %v1141
        %v1288 = vpack.c.b16 %v1144, %v1143
        %v1289 = vpack.c.b16 %v1146, %v1145
        %v1290 = vpack.c.b16 %v1148, %v1147
        %v1291 = vpack.c.b16 %v1150, %v1149
        %v1292 = vpack.c.b16 %v1152, %v1151
        %v1293 = vpack.c.b16 %v1154, %v1153
        %v1294 = vpack.c.b16 %v1156, %v1155
        %v1295 = vpack.c.b16 %v1158, %v1157
        %v1296 = vpack.c.b16 %v1160, %v1159
        %v1297 = vpack.c.b16 %v1162, %v1161
        %v1298 = vpack.c.b16 %v1164, %v1163
        %v1299 = vpack.c.b16 %v1166, %v1165
        %v1300 = vpack.c.b16 %v1168, %v1167
        %v1301 = vpack.c.b16 %v1170, %v1169
        %v1302 = vpack.c.b16 %v1172, %v1171
        %v1303 = vpack.c.b16 %v1174, %v1173
        %v1304 = vpack.c.b16 %v1176, %v1175
        %1433 = vmatprep.subr.bf16.mxu0 0
        %1434 = vmatpush1.bf16.msra.mxu0 %v1177
        %1435 = vmatprep.subr.bf16.mxu0 0
        %1436 = vmatpush1.bf16.msra.mxu0 %v1178
        %1437 = vmatprep.subr.bf16.mxu0 0
        %1438 = vmatpush1.bf16.msra.mxu0 %v1179
        %1439 = vmatprep.subr.bf16.mxu0 0
        %1440 = vmatpush1.bf16.msra.mxu0 %v1180
        %1441 = vmatprep.subr.bf16.mxu0 0
        %1442 = vmatpush1.bf16.msra.mxu0 %v1181
        %1443 = vmatprep.subr.bf16.mxu0 0
        %1444 = vmatpush1.bf16.msra.mxu0 %v1182
        %1445 = vmatprep.subr.bf16.mxu0 0
        %1446 = vmatpush1.bf16.msra.mxu0 %v1183
        %1447 = vmatprep.subr.bf16.mxu0 0
        %1448 = vmatpush1.bf16.msra.mxu0 %v1184
        %1449 = vmatprep.subr.bf16.mxu0 0
        %1450 = vmatpush1.bf16.msra.mxu0 %v1185
        %1451 = vmatprep.subr.bf16.mxu0 0
        %1452 = vmatpush1.bf16.msra.mxu0 %v1186
        %1453 = vmatprep.subr.bf16.mxu0 0
        %1454 = vmatpush1.bf16.msra.mxu0 %v1187
        %1455 = vmatprep.subr.bf16.mxu0 0
        %1456 = vmatpush1.bf16.msra.mxu0 %v1188
        %1457 = vmatprep.subr.bf16.mxu0 0
        %1458 = vmatpush1.bf16.msra.mxu0 %v1189
        %1459 = vmatprep.subr.bf16.mxu0 0
        %1460 = vmatpush1.bf16.msra.mxu0 %v1190
        %1461 = vmatprep.subr.bf16.mxu0 0
        %1462 = vmatpush1.bf16.msra.mxu0 %v1191
        %1463 = vmatprep.subr.bf16.mxu0 0
        %1464 = vmatpush1.bf16.msra.mxu0 %v1192
        %1465 = vmatprep.mubr.bf16.mxu0 %v634
        %1466 = vmatmul.mubr.bf16.gmra.mrb[0].mxu0 %v633
        %v1467 = vpop.f32.mrb[0].mxu0
        %v1468 = vadd.f32 0.0, %v1467
        %v1469 = vpop.f32.mrb[0].mxu0
        %v1470 = vpop.f32.mrb[0].mxu0
        %v1471 = vpop.f32.mrb[0].mxu0
        %1472 = vdwg.mxu0
        %1473 = vmatprep.subr.bf16.mxu0 0
        %1474 = vmatpush1.bf16.msra.mxu0 %v1193
        %1475 = vmatprep.subr.bf16.mxu0 0
        %1476 = vmatpush1.bf16.msra.mxu0 %v1194
        %1477 = vmatprep.subr.bf16.mxu0 0
        %1478 = vmatpush1.bf16.msra.mxu0 %v1195
        %1479 = vmatprep.subr.bf16.mxu0 0
        %1480 = vmatpush1.bf16.msra.mxu0 %v1196
        %1481 = vmatprep.subr.bf16.mxu0 0
        %1482 = vmatpush1.bf16.msra.mxu0 %v1197
        %1483 = vmatprep.subr.bf16.mxu0 0
        %1484 = vmatpush1.bf16.msra.mxu0 %v1198
        %1485 = vmatprep.subr.bf16.mxu0 0
        %1486 = vmatpush1.bf16.msra.mxu0 %v1199
        %1487 = vmatprep.subr.bf16.mxu0 0
        %1488 = vmatpush1.bf16.msra.mxu0 %v1200
        %1489 = vmatprep.subr.bf16.mxu0 0
        %1490 = vmatpush1.bf16.msra.mxu0 %v1201
        %1491 = vmatprep.subr.bf16.mxu0 0
        %1492 = vmatpush1.bf16.msra.mxu0 %v1202
        %1493 = vmatprep.subr.bf16.mxu0 0
        %1494 = vmatpush1.bf16.msra.mxu0 %v1203
        %1495 = vmatprep.subr.bf16.mxu0 0
        %1496 = vmatpush1.bf16.msra.mxu0 %v1204
        %1497 = vmatprep.subr.bf16.mxu0 0
        %1498 = vmatpush1.bf16.msra.mxu0 %v1205
        %1499 = vmatprep.subr.bf16.mxu0 0
        %1500 = vmatpush1.bf16.msra.mxu0 %v1206
        %1501 = vmatprep.subr.bf16.mxu0 0
        %1502 = vmatpush1.bf16.msra.mxu0 %v1207
        %1503 = vmatprep.subr.bf16.mxu0 0
        %1504 = vmatpush1.bf16.msra.mxu0 %v1208
        %1505 = vmatprep.mubr.bf16.mxu0 %v636
        %1506 = vmatmul.mubr.bf16.gmra.mrb[0].mxu0 %v635
        %v1507 = vpop.f32.mrb[0].mxu0
        %v1508 = vadd.f32 %v1468, %v1507
        %v1509 = vpop.f32.mrb[0].mxu0
        %v1510 = vpop.f32.mrb[0].mxu0
        %v1511 = vpop.f32.mrb[0].mxu0
        %1512 = vdwg.mxu0
        %1513 = vmatprep.subr.bf16.mxu0 0
        %1514 = vmatpush1.bf16.msra.mxu0 %v1209
        %1515 = vmatprep.subr.bf16.mxu0 0
        %1516 = vmatpush1.bf16.msra.mxu0 %v1210
        %1517 = vmatprep.subr.bf16.mxu0 0
        %1518 = vmatpush1.bf16.msra.mxu0 %v1211
        %1519 = vmatprep.subr.bf16.mxu0 0
        %1520 = vmatpush1.bf16.msra.mxu0 %v1212
        %1521 = vmatprep.subr.bf16.mxu0 0
        %1522 = vmatpush1.bf16.msra.mxu0 %v1213
        %1523 = vmatprep.subr.bf16.mxu0 0
        %1524 = vmatpush1.bf16.msra.mxu0 %v1214
        %1525 = vmatprep.subr.bf16.mxu0 0
        %1526 = vmatpush1.bf16.msra.mxu0 %v1215
        %1527 = vmatprep.subr.bf16.mxu0 0
        %1528 = vmatpush1.bf16.msra.mxu0 %v1216
        %1529 = vmatprep.subr.bf16.mxu0 0
        %1530 = vmatpush1.bf16.msra.mxu0 %v1217
        %1531 = vmatprep.subr.bf16.mxu0 0
        %1532 = vmatpush1.bf16.msra.mxu0 %v1218
        %1533 = vmatprep.subr.bf16.mxu0 0
        %1534 = vmatpush1.bf16.msra.mxu0 %v1219
        %1535 = vmatprep.subr.bf16.mxu0 0
        %1536 = vmatpush1.bf16.msra.mxu0 %v1220
        %1537 = vmatprep.subr.bf16.mxu0 0
        %1538 = vmatpush1.bf16.msra.mxu0 %v1221
        %1539 = vmatprep.subr.bf16.mxu0 0
        %1540 = vmatpush1.bf16.msra.mxu0 %v1222
        %1541 = vmatprep.subr.bf16.mxu0 0
        %1542 = vmatpush1.bf16.msra.mxu0 %v1223
        %1543 = vmatprep.subr.bf16.mxu0 0
        %1544 = vmatpush1.bf16.msra.mxu0 %v1224
        %1545 = vmatprep.mubr.bf16.mxu0 %v638
        %1546 = vmatmul.mubr.bf16.gmra.mrb[0].mxu0 %v637
        %v1547 = vpop.f32.mrb[0].mxu0
        %v1548 = vadd.f32 %v1508, %v1547
        %v1549 = vpop.f32.mrb[0].mxu0
        %v1550 = vpop.f32.mrb[0].mxu0
        %v1551 = vpop.f32.mrb[0].mxu0
        %1552 = vdwg.mxu0
        %1553 = vmatprep.subr.bf16.mxu0 0
        %1554 = vmatpush1.bf16.msra.mxu0 %v1225
        %1555 = vmatprep.subr.bf16.mxu0 0
        %1556 = vmatpush1.bf16.msra.mxu0 %v1226
        %1557 = vmatprep.subr.bf16.mxu0 0
        %1558 = vmatpush1.bf16.msra.mxu0 %v1227
        %1559 = vmatprep.subr.bf16.mxu0 0
        %1560 = vmatpush1.bf16.msra.mxu0 %v1228
        %1561 = vmatprep.subr.bf16.mxu0 0
        %1562 = vmatpush1.bf16.msra.mxu0 %v1229
        %1563 = vmatprep.subr.bf16.mxu0 0
        %1564 = vmatpush1.bf16.msra.mxu0 %v1230
        %1565 = vmatprep.subr.bf16.mxu0 0
        %1566 = vmatpush1.bf16.msra.mxu0 %v1231
        %1567 = vmatprep.subr.bf16.mxu0 0
        %1568 = vmatpush1.bf16.msra.mxu0 %v1232
        %1569 = vmatprep.subr.bf16.mxu0 0
        %1570 = vmatpush1.bf16.msra.mxu0 %v1233
        %1571 = vmatprep.subr.bf16.mxu0 0
        %1572 = vmatpush1.bf16.msra.mxu0 %v1234
        %1573 = vmatprep.subr.bf16.mxu0 0
        %1574 = vmatpush1.bf16.msra.mxu0 %v1235
        %1575 = vmatprep.subr.bf16.mxu0 0
        %1576 = vmatpush1.bf16.msra.mxu0 %v1236
        %1577 = vmatprep.subr.bf16.mxu0 0
        %1578 = vmatpush1.bf16.msra.mxu0 %v1237
        %1579 = vmatprep.subr.bf16.mxu0 0
        %1580 = vmatpush1.bf16.msra.mxu0 %v1238
        %1581 = vmatprep.subr.bf16.mxu0 0
        %1582 = vmatpush1.bf16.msra.mxu0 %v1239
        %1583 = vmatprep.subr.bf16.mxu0 0
        %1584 = vmatpush1.bf16.msra.mxu0 %v1240
        %1585 = vmatprep.mubr.bf16.mxu0 %v640
        %1586 = vmatmul.mubr.bf16.gmra.mrb[0].mxu0 %v639
        %v1587 = vpop.f32.mrb[0].mxu0
        %v1588 = vadd.f32 %v1548, %v1587
        %v1589 = vpop.f32.mrb[0].mxu0
        %v1590 = vpop.f32.mrb[0].mxu0
        %v1591 = vpop.f32.mrb[0].mxu0
        %1592 = vdwg.mxu0
        %1593 = vmatprep.subr.bf16.mxu0 0
        %1594 = vmatpush1.bf16.msra.mxu0 %v1241
        %1595 = vmatprep.subr.bf16.mxu0 0
        %1596 = vmatpush1.bf16.msra.mxu0 %v1242
        %1597 = vmatprep.subr.bf16.mxu0 0
        %1598 = vmatpush1.bf16.msra.mxu0 %v1243
        %1599 = vmatprep.subr.bf16.mxu0 0
        %1600 = vmatpush1.bf16.msra.mxu0 %v1244
        %1601 = vmatprep.subr.bf16.mxu0 0
        %1602 = vmatpush1.bf16.msra.mxu0 %v1245
        %1603 = vmatprep.subr.bf16.mxu0 0
        %1604 = vmatpush1.bf16.msra.mxu0 %v1246
        %1605 = vmatprep.subr.bf16.mxu0 0
        %1606 = vmatpush1.bf16.msra.mxu0 %v1247
        %1607 = vmatprep.subr.bf16.mxu0 0
        %1608 = vmatpush1.bf16.msra.mxu0 %v1248
        %1609 = vmatprep.subr.bf16.mxu0 0
        %1610 = vmatpush1.bf16.msra.mxu0 %v1249
        %1611 = vmatprep.subr.bf16.mxu0 0
        %1612 = vmatpush1.bf16.msra.mxu0 %v1250
        %1613 = vmatprep.subr.bf16.mxu0 0
        %1614 = vmatpush1.bf16.msra.mxu0 %v1251
        %1615 = vmatprep.subr.bf16.mxu0 0
        %1616 = vmatpush1.bf16.msra.mxu0 %v1252
        %1617 = vmatprep.subr.bf16.mxu0 0
        %1618 = vmatpush1.bf16.msra.mxu0 %v1253
        %1619 = vmatprep.subr.bf16.mxu0 0
        %1620 = vmatpush1.bf16.msra.mxu0 %v1254
        %1621 = vmatprep.subr.bf16.mxu0 0
        %1622 = vmatpush1.bf16.msra.mxu0 %v1255
        %1623 = vmatprep.subr.bf16.mxu0 0
        %1624 = vmatpush1.bf16.msra.mxu0 %v1256
        %1625 = vmatprep.mubr.bf16.mxu0 %v642
        %1626 = vmatmul.mubr.bf16.gmra.mrb[0].mxu0 %v641
        %v1627 = vpop.f32.mrb[0].mxu0
        %v1628 = vadd.f32 %v1588, %v1627
        %v1629 = vpop.f32.mrb[0].mxu0
        %v1630 = vpop.f32.mrb[0].mxu0
        %v1631 = vpop.f32.mrb[0].mxu0
        %1632 = vdwg.mxu0
        %1633 = vmatprep.subr.bf16.mxu0 0
        %1634 = vmatpush1.bf16.msra.mxu0 %v1257
        %1635 = vmatprep.subr.bf16.mxu0 0
        %1636 = vmatpush1.bf16.msra.mxu0 %v1258
        %1637 = vmatprep.subr.bf16.mxu0 0
        %1638 = vmatpush1.bf16.msra.mxu0 %v1259
        %1639 = vmatprep.subr.bf16.mxu0 0
        %1640 = vmatpush1.bf16.msra.mxu0 %v1260
        %1641 = vmatprep.subr.bf16.mxu0 0
        %1642 = vmatpush1.bf16.msra.mxu0 %v1261
        %1643 = vmatprep.subr.bf16.mxu0 0
        %1644 = vmatpush1.bf16.msra.mxu0 %v1262
        %1645 = vmatprep.subr.bf16.mxu0 0
        %1646 = vmatpush1.bf16.msra.mxu0 %v1263
        %1647 = vmatprep.subr.bf16.mxu0 0
        %1648 = vmatpush1.bf16.msra.mxu0 %v1264
        %1649 = vmatprep.subr.bf16.mxu0 0
        %1650 = vmatpush1.bf16.msra.mxu0 %v1265
        %1651 = vmatprep.subr.bf16.mxu0 0
        %1652 = vmatpush1.bf16.msra.mxu0 %v1266
        %1653 = vmatprep.subr.bf16.mxu0 0
        %1654 = vmatpush1.bf16.msra.mxu0 %v1267
        %1655 = vmatprep.subr.bf16.mxu0 0
        %1656 = vmatpush1.bf16.msra.mxu0 %v1268
        %1657 = vmatprep.subr.bf16.mxu0 0
        %1658 = vmatpush1.bf16.msra.mxu0 %v1269
        %1659 = vmatprep.subr.bf16.mxu0 0
        %1660 = vmatpush1.bf16.msra.mxu0 %v1270
        %1661 = vmatprep.subr.bf16.mxu0 0
        %1662 = vmatpush1.bf16.msra.mxu0 %v1271
        %1663 = vmatprep.subr.bf16.mxu0 0
        %1664 = vmatpush1.bf16.msra.mxu0 %v1272
        %1665 = vmatprep.mubr.bf16.mxu0 %v644
        %1666 = vmatmul.mubr.bf16.gmra.mrb[0].mxu0 %v643
        %v1667 = vpop.f32.mrb[0].mxu0
        %v1668 = vadd.f32 %v1628, %v1667
        %v1669 = vpop.f32.mrb[0].mxu0
        %v1670 = vpop.f32.mrb[0].mxu0
        %v1671 = vpop.f32.mrb[0].mxu0
        %1672 = vdwg.mxu0
        %1673 = vmatprep.subr.bf16.mxu0 0
        %1674 = vmatpush1.bf16.msra.mxu0 %v1273
        %1675 = vmatprep.subr.bf16.mxu0 0
        %1676 = vmatpush1.bf16.msra.mxu0 %v1274
        %1677 = vmatprep.subr.bf16.mxu0 0
        %1678 = vmatpush1.bf16.msra.mxu0 %v1275
        %1679 = vmatprep.subr.bf16.mxu0 0
        %1680 = vmatpush1.bf16.msra.mxu0 %v1276
        %1681 = vmatprep.subr.bf16.mxu0 0
        %1682 = vmatpush1.bf16.msra.mxu0 %v1277
        %1683 = vmatprep.subr.bf16.mxu0 0
        %1684 = vmatpush1.bf16.msra.mxu0 %v1278
        %1685 = vmatprep.subr.bf16.mxu0 0
        %1686 = vmatpush1.bf16.msra.mxu0 %v1279
        %1687 = vmatprep.subr.bf16.mxu0 0
        %1688 = vmatpush1.bf16.msra.mxu0 %v1280
        %1689 = vmatprep.subr.bf16.mxu0 0
        %1690 = vmatpush1.bf16.msra.mxu0 %v1281
        %1691 = vmatprep.subr.bf16.mxu0 0
        %1692 = vmatpush1.bf16.msra.mxu0 %v1282
        %1693 = vmatprep.subr.bf16.mxu0 0
        %1694 = vmatpush1.bf16.msra.mxu0 %v1283
        %1695 = vmatprep.subr.bf16.mxu0 0
        %1696 = vmatpush1.bf16.msra.mxu0 %v1284
        %1697 = vmatprep.subr.bf16.mxu0 0
        %1698 = vmatpush1.bf16.msra.mxu0 %v1285
        %1699 = vmatprep.subr.bf16.mxu0 0
        %1700 = vmatpush1.bf16.msra.mxu0 %v1286
        %1701 = vmatprep.subr.bf16.mxu0 0
        %1702 = vmatpush1.bf16.msra.mxu0 %v1287
        %1703 = vmatprep.subr.bf16.mxu0 0
        %1704 = vmatpush1.bf16.msra.mxu0 %v1288
        %1705 = vmatprep.mubr.bf16.mxu0 %v646
        %1706 = vmatmul.mubr.bf16.gmra.mrb[0].mxu0 %v645
        %v1707 = vpop.f32.mrb[0].mxu0
        %v1708 = vadd.f32 %v1668, %v1707
        %v1709 = vpop.f32.mrb[0].mxu0
        %v1710 = vpop.f32.mrb[0].mxu0
        %v1711 = vpop.f32.mrb[0].mxu0
        %1712 = vdwg.mxu0
        %1713 = vmatprep.subr.bf16.mxu0 0
        %1714 = vmatpush1.bf16.msra.mxu0 %v1289
        %1715 = vmatprep.subr.bf16.mxu0 0
        %1716 = vmatpush1.bf16.msra.mxu0 %v1290
        %1717 = vmatprep.subr.bf16.mxu0 0
        %1718 = vmatpush1.bf16.msra.mxu0 %v1291
        %1719 = vmatprep.subr.bf16.mxu0 0
        %1720 = vmatpush1.bf16.msra.mxu0 %v1292
        %1721 = vmatprep.subr.bf16.mxu0 0
        %1722 = vmatpush1.bf16.msra.mxu0 %v1293
        %1723 = vmatprep.subr.bf16.mxu0 0
        %1724 = vmatpush1.bf16.msra.mxu0 %v1294
        %1725 = vmatprep.subr.bf16.mxu0 0
        %1726 = vmatpush1.bf16.msra.mxu0 %v1295
        %1727 = vmatprep.subr.bf16.mxu0 0
        %1728 = vmatpush1.bf16.msra.mxu0 %v1296
        %1729 = vmatprep.subr.bf16.mxu0 0
        %1730 = vmatpush1.bf16.msra.mxu0 %v1297
        %1731 = vmatprep.subr.bf16.mxu0 0
        %1732 = vmatpush1.bf16.msra.mxu0 %v1298
        %1733 = vmatprep.subr.bf16.mxu0 0
        %1734 = vmatpush1.bf16.msra.mxu0 %v1299
        %1735 = vmatprep.subr.bf16.mxu0 0
        %1736 = vmatpush1.bf16.msra.mxu0 %v1300
        %1737 = vmatprep.subr.bf16.mxu0 0
        %1738 = vmatpush1.bf16.msra.mxu0 %v1301
        %1739 = vmatprep.subr.bf16.mxu0 0
        %1740 = vmatpush1.bf16.msra.mxu0 %v1302
        %1741 = vmatprep.subr.bf16.mxu0 0
        %1742 = vmatpush1.bf16.msra.mxu0 %v1303
        %1743 = vmatprep.subr.bf16.mxu0 0
        %1744 = vmatpush1.bf16.msra.mxu0 %v1304
        %1745 = vmatprep.mubr.bf16.mxu0 %v648
        %1746 = vmatmul.mubr.bf16.gmra.mrb[0].mxu0 %v647
        %v1747 = vpop.f32.mrb[0].mxu0
        %v1748 = vadd.f32 %v1708, %v1747
        %v1749 = vpop.f32.mrb[0].mxu0
        %v1750 = vpop.f32.mrb[0].mxu0
        %v1751 = vpop.f32.mrb[0].mxu0
        %1752 = vdwg.mxu0
        %v1753 = vadd.f32 %v344, %v1748
        %1754 = vst [vmem:[#allocation2] sm:$0xff] %v1753
        %p1755 = scmp.eq.s32.totalorder %s31, 1
        // Predicated region
        $region53: #{tpu_custom_call.1} parent=35 // pred_check
          %p1756 = pneg %p1755
        $region54: #{tpu_custom_call.1} parent=35 // pred_check_branch
          %1758 = sbr.rel (%p1756) target = $region56
        $region55: #{tpu_custom_call.1} parent=35 // pred_region
          %v1759 = vld [vmem:[#allocation2] sm:$0xff]
          %v1760 = vld [vmem:[%s291] sm:$0x1]
          %v1762 = vlaneseq
          %v1763 = vshrl.u32 %v1762, 7
          %v1764 = vsub.s32 0, %v1763
          %v1765 = vrot.slane %v1760, %v1764
          %v1767 = vadd.f32 %v1759, %v1765
          %v1768 = vmax.f32 %v1767, 0.0
          %v1769 = vld [vmem:[%s336] sm:$0xff]
          %v1770 = vld [vmem:[%s336 + $0x8] sm:$0xff]
          %v1771 = vld [vmem:[%s336 + $0x10] sm:$0xff]
          %v1772 = vld [vmem:[%s336 + $0x18] sm:$0xff]
          %v1773 = vld [vmem:[%s336 + $0x20] sm:$0xff]
          %v1774 = vld [vmem:[%s336 + $0x28] sm:$0xff]
          %v1775 = vld [vmem:[%s336 + $0x30] sm:$0xff]
          %v1776 = vld [vmem:[%s336 + $0x38] sm:$0xff]
          %v1777 = vld [vmem:[%s336 + $0x40] sm:$0xff]
          %v1778 = vld [vmem:[%s336 + $0x48] sm:$0xff]
          %v1779 = vld [vmem:[%s336 + $0x50] sm:$0xff]
          %v1780 = vld [vmem:[%s336 + $0x58] sm:$0xff]
          %v1781 = vld [vmem:[%s336 + $0x60] sm:$0xff]
          %v1782 = vld [vmem:[%s336 + $0x68] sm:$0xff]
          %v1783 = vld [vmem:[%s336 + $0x70] sm:$0xff]
          %v1784 = vld [vmem:[%s336 + $0x78] sm:$0xff]
          %1785 = vmatprep.subr.mxu0 0.0
          %1786 = vmatpush1.msra.mxu0 %v1769
          %1787 = vmatprep.subr.mxu0 0.0
          %1788 = vmatpush1.msra.mxu0 %v1770
          %1789 = vmatprep.subr.mxu0 0.0
          %1790 = vmatpush1.msra.mxu0 %v1771
          %1791 = vmatprep.subr.mxu0 0.0
          %1792 = vmatpush1.msra.mxu0 %v1772
          %1793 = vmatprep.subr.mxu0 0.0
          %1794 = vmatpush1.msra.mxu0 %v1773
          %1795 = vmatprep.subr.mxu0 0.0
          %1796 = vmatpush1.msra.mxu0 %v1774
          %1797 = vmatprep.subr.mxu0 0.0
          %1798 = vmatpush1.msra.mxu0 %v1775
          %1799 = vmatprep.subr.mxu0 0.0
          %1800 = vmatpush1.msra.mxu0 %v1776
          %1801 = vmatprep.subr.mxu0 0.0
          %1802 = vmatpush1.msra.mxu0 %v1777
          %1803 = vmatprep.subr.mxu0 0.0
          %1804 = vmatpush1.msra.mxu0 %v1778
          %1805 = vmatprep.subr.mxu0 0.0
          %1806 = vmatpush1.msra.mxu0 %v1779
          %1807 = vmatprep.subr.mxu0 0.0
          %1808 = vmatpush1.msra.mxu0 %v1780
          %1809 = vmatprep.subr.mxu0 0.0
          %1810 = vmatpush1.msra.mxu0 %v1781
          %1811 = vmatprep.subr.mxu0 0.0
          %1812 = vmatpush1.msra.mxu0 %v1782
          %1813 = vmatprep.subr.mxu0 0.0
          %1814 = vmatpush1.msra.mxu0 %v1783
          %1815 = vmatprep.subr.mxu0 0.0
          %1816 = vmatpush1.msra.mxu0 %v1784
          %1817 = vmatprep.subr.mxu0 0.0
          %1818 = vmatpush1.msra.mxu0 0.0
          %1819 = vmatprep.subr.mxu0 0.0
          %1820 = vmatpush1.msra.mxu0 0.0
          %1821 = vmatprep.subr.mxu0 0.0
          %1822 = vmatpush1.msra.mxu0 0.0
          %1823 = vmatprep.subr.mxu0 0.0
          %1824 = vmatpush1.msra.mxu0 0.0
          %1825 = vmatprep.subr.mxu0 0.0
          %1826 = vmatpush1.msra.mxu0 0.0
          %1827 = vmatprep.subr.mxu0 0.0
          %1828 = vmatpush1.msra.mxu0 0.0
          %1829 = vmatprep.subr.mxu0 0.0
          %1830 = vmatpush1.msra.mxu0 0.0
          %1831 = vmatprep.subr.mxu0 0.0
          %1832 = vmatpush1.msra.mxu0 0.0
          %1833 = vmatprep.subr.mxu0 0.0
          %1834 = vmatpush1.msra.mxu0 0.0
          %1835 = vmatprep.subr.mxu0 0.0
          %1836 = vmatpush1.msra.mxu0 0.0
          %1837 = vmatprep.subr.mxu0 0.0
          %1838 = vmatpush1.msra.mxu0 0.0
          %1839 = vmatprep.subr.mxu0 0.0
          %1840 = vmatpush1.msra.mxu0 0.0
          %1841 = vmatprep.subr.mxu0 0.0
          %1842 = vmatpush1.msra.mxu0 0.0
          %1843 = vmatprep.subr.mxu0 0.0
          %1844 = vmatpush1.msra.mxu0 0.0
          %1845 = vmatprep.subr.mxu0 0.0
          %1846 = vmatpush1.msra.mxu0 0.0
          %1847 = vmatprep.subr.mxu0 0.0
          %1848 = vmatpush1.msra.mxu0 0.0
          %1849 = vmatprep.mubr.f32.mxu0 0.0
          %1850 = vmatmul.mubr.f32.gmra.mrb[0].mxu0 %v1768
          %v1851 = vpop.f32.mrb[0].mxu0
          %v1852 = vadd.f32 0.0, %v1851
          %v1853 = vpop.f32.mrb[0].mxu0
          %1854 = vdwg.mxu0
          %vm1855 = vcmask 80896
          %1856 = vst.msk [vmem:[%s329] sm:$0xff] %vm1855, %v1852
        $region56: #{tpu_custom_call.1} parent=35 // pred_fallthru
          _
        %s1857 = sand.u32 %s161, 1
        %s1858 = scalar_lea.sflag [#allocation5], %s1857
        %s1859 = sand.u32 %s161, 1
        %s1860 = smul.addr %s1859, 8
        %s1861 = scalar_lea.vmem [#allocation9], %s1860
        // Predicated region
        $region57: #{tpu_custom_call.1} parent=35 // pred_check
          %p1862 = pneg %p171
        $region58: #{tpu_custom_call.1} parent=35 // pred_check_branch
          %1864 = sbr.rel (%p1862) target = $region60
        $region59: #{tpu_custom_call.1} parent=35 // pred_region
          %s1866 = ssub.s32 128, 128
          %1867 = vsyncadd %s1858, %s1866
          %s1868 = sadd.s32 %s29, %s30
          %s1869 = smul.addr %s1868, 128
          %s1870 = scalar_lea.hbm %s4, %s1869
          %s1872 = sshll.u32 %s1861, 4
          %s1873 = int_to_ptr.vmem [resolvable:$true] %s1872
          %1875 = dma.vmem_to_hbm [thread:$0]  %s1873, 128, %s1870, %s1858
        $region60: #{tpu_custom_call.1} parent=35 // pred_fallthru
          _
      $region36: #{tpu_custom_call.1} parent=5 // pred_fallthru
        _
      %p1876 = scmp.le.s32.totalorder 2, %s19
      // Predicated region
      $region61: #{tpu_custom_call.1} parent=5 // pred_check
        %p1877 = pneg %p1876
      $region62: #{tpu_custom_call.1} parent=5 // pred_check_branch
        %1879 = sbr.rel (%p1877) target = $region64
      $region63: #{tpu_custom_call.1} parent=5 // pred_region
        %s1880 = ssub.s32 %s19, 2
        // Predicated region
        $region65: #{tpu_custom_call.1} parent=63 // pred_check
          %p1881 = pneg %p177
        $region66: #{tpu_custom_call.1} parent=63 // pred_check_branch
          %1883 = sbr.rel (%p1881) target = $region68
        $region67: #{tpu_custom_call.1} parent=63 // pred_region
          %s1884 = sand.u32 %s162, 1
          %s1885 = scalar_lea.sflag [#allocation5], %s1884
          %s1886 = sand.u32 %s162, 1
          %s1887 = smul.addr %s1886, 8
          %s1888 = scalar_lea.vmem [#allocation9], %s1887
          %1889 = dma.done %s1885, 128
        $region68: #{tpu_custom_call.1} parent=63 // pred_fallthru
          _
      $region64: #{tpu_custom_call.1} parent=5 // pred_fallthru
        _
    $region6: #{tpu_custom_call.1} parent=1 // loop_footer
      %s23 = sadd.s32 1, %s19
    $region7: #{tpu_custom_call.1} parent=1 // loop_footer_branch
      %18 = sbr.rel target = $region3
    $region8: #{tpu_custom_call.1} parent=1 // loop_exit
      _
    %1890 = vsyncpa [#allocation4], 1
    %s1891 = scalar_lea.sflag [#allocation4], 1
    %1892 = vsyncpa %s1891, 1
    %1893 = vsyncpa [#allocation7], 1
    %s1894 = scalar_lea.sflag [#allocation7], 1
    %1895 = vsyncpa %s1894, 1
    %1896 = vsyncpa [#allocation5], 1
    %s1897 = scalar_lea.sflag [#allocation5], 1
    %1898 = vsyncpa %s1897, 1

</llo_original>
